<compile_context>
chip_gen: v5e
topology: v5e:2x2
jax: 0.10.0
libtpu: 0.0.40
codegen_flags: <defaults>
</compile_context>

<pallas_src>
import functools
import warnings

import jax
import jax.numpy as jnp
import numpy as np
from jax.experimental import pallas as pl
from jax.experimental.pallas import tpu as pltpu

IMAGE_SIZE = 224
NOISE_PERCENTAGE = 0.03
LANE = 128


# ---------------------------------------------------------------------------
# Parameter / mask construction (deterministic, mirrors the PyTorch __init__)
# ---------------------------------------------------------------------------
def patch_initialization(key, noise_percentage=NOISE_PERCENTAGE):
    image_size = (3, IMAGE_SIZE, IMAGE_SIZE)
    mask_length = int((noise_percentage * image_size[1] * image_size[2]) ** 0.5)
    patch = jax.random.uniform(key, (image_size[0], mask_length, mask_length),
                               dtype=jnp.float32)
    return patch


def mask_generation(patch):
    image_size = (3, IMAGE_SIZE, IMAGE_SIZE)
    applied_patch = jnp.zeros(image_size, dtype=jnp.float32)
    x_location = image_size[1] - 14 - patch.shape[1]
    y_location = image_size[1] - 14 - patch.shape[2]
    applied_patch = applied_patch.at[
        :, x_location:x_location + patch.shape[1],
        y_location:y_location + patch.shape[2]].set(patch)
    mask = jnp.where(applied_patch != 0, 1.0, 0.0).astype(jnp.float32)
    return mask, applied_patch, x_location, y_location


def init_advclip_params(seed=0, image_size=IMAGE_SIZE):
    k_uap, k_patch, k_delta = jax.random.split(jax.random.PRNGKey(seed), 3)
    uap = jax.random.uniform(k_uap, (1, 3, image_size, image_size),
                             dtype=jnp.float32)        # nn.Parameter(torch.rand)
    patch = patch_initialization(k_patch)
    mask, _, _, _ = mask_generation(patch)
    mask = mask[None]                                   # (1, 3, 224, 224)
    # delta parameter exists in the module but is unused in forward
    _ = jax.random.uniform(k_delta, (1, 3, image_size, image_size),
                           dtype=jnp.float32)
    return uap, mask


# ---------------------------------------------------------------------------
# TPU generation profile (VMEM capacity / TensorCore count heuristics)
# ---------------------------------------------------------------------------
@functools.lru_cache(maxsize=1)
def _tpu_profile():
    vmem_cap = None
    try:
        info = pltpu.get_tpu_info()
        cap = getattr(info, "vmem_capacity_bytes", None)
        if cap:
            vmem_cap = int(cap)
    except Exception:
        vmem_cap = None
    kind = ""
    try:
        kind = str(jax.devices()[0].device_kind).lower()
    except Exception:
        pass
    # v7x signature: 2 TensorCores per chip, 64 MiB VMEM per TC.
    looks_v7x = ("7" in kind) or (vmem_cap is not None and vmem_cap <= (64 << 20))
    if vmem_cap is None:
        vmem_cap = 64 << 20          # conservative fallback (v7x per-TC size)
    num_tc = 2 if looks_v7x else 1
    return vmem_cap, num_tc, looks_v7x


# ---------------------------------------------------------------------------
# Pallas kernel: fused blend + clamp  (out = clip((1-m)*img + m*uap, 0, 1))
# ---------------------------------------------------------------------------
def _attack_kernel(img_ref, mask_ref, uap_ref, out_ref):
    # img_ref: (TB, R, 128) native dtype; mask/uap: (R, 128) f32, broadcast.
    x = img_ref[...].astype(jnp.float32)
    m = mask_ref[...]
    u = uap_ref[...]
    y = (1.0 - m) * x + m * u            # same evaluation order as reference
    out_ref[...] = jnp.clip(y, 0.0, 1.0).astype(out_ref.dtype)


def advclip_attack_pallas(images, uap, mask, *, check_pixel_range=False,
                          donate_images=False):
    """images: (B, 3, H, W) floats in [0, 1]; uap/mask: (1, 3, Hu, Wu)."""
    if images.ndim == 3:
        images = images[None]
    B, C, H, W = images.shape

    # Glue: resize UAP / mask if spatial sizes mismatch (bilinear,
    # align_corners=False semantics == jax.image.resize 'linear').
    if H != uap.shape[2] or W != uap.shape[3]:
        warnings.warn('The size of UAP is not equal to the size of images, '
                      'interpolate UAP to the size of images may degrade ASR.')
        uap = jax.image.resize(uap, (1, C, H, W), method='linear')
        mask = jax.image.resize(mask, (1, C, H, W), method='linear')

    # Optional device-side pixel-range check (forces a D2H sync; off by
    # default so the wrapper stays jit-friendly).
    if check_pixel_range:
        lo = float(jnp.min(images))
        hi = float(jnp.max(images))
        if lo < 0.0 or hi > 1.0:
            raise ValueError('pixel values should be between 0 and 1')

    in_dtype = images.dtype
    # TODO(synk): integer image dtypes would truncate to {0,1} after the cast
    # back (same as torch .type()); float dtypes are the intended use.
    mask32 = mask.astype(jnp.float32)
    uap32 = uap.astype(jnp.float32)

    # Lane-dense layout: flatten each image to (R, 128); pad the flattened
    # length up to a lane multiple so every output store is an unmasked `vst`.
    total = C * H * W
    R = int(pl.cdiv(total, LANE))
    padded = R * LANE
    pad = padded - total

    img_flat = images.reshape(B, total)
    mask_flat = mask32.reshape(total)
    uap_flat = uap32.reshape(total)
    if pad:
        img_flat = jnp.pad(img_flat, ((0, 0), (0, pad)))
        mask_flat = jnp.pad(mask_flat, (0, pad))
        uap_flat = jnp.pad(uap_flat, (0, pad))
    img2d = img_flat.reshape(B, R, LANE)
    mask2d = mask_flat.reshape(R, LANE)
    uap2d = uap_flat.reshape(R, LANE)

    # Generation-aware block sizing: biggest multi-image block that fits the
    # scoped VMEM budget (double-buffered input + output, broadcast mask/uap).
    vmem_cap, num_tc, looks_v7x = _tpu_profile()
    vmem_limit = int(min(vmem_cap // 2, 96 << 20))   # 64 MiB on v5e/v6e, 32 on v7x
    budget = int(vmem_limit * 0.85)                  # headroom for compiler scratch
    in_bytes = int(jnp.dtype(in_dtype).itemsize)
    bcast_bufs = 1 if looks_v7x else 2
    bcast_bytes = bcast_bufs * 2 * R * LANE * 4      # mask + uap blocks (f32)
    per_image = 2 * R * LANE * in_bytes * 2          # 2x (in + out), double-buffered
    # TODO(synk): for huge images (single image > budget) also tile over R.
    TB = int(max(1, (budget - bcast_bytes) // per_image))
    TB = min(TB, B)
    if num_tc >= 2 and B > 1:
        # Force an even number of grid steps so both TensorCores stay balanced.
        steps = int(pl.cdiv(B, TB))
        even_steps = min(B, ((steps + 1) // 2) * 2)
        TB = int(pl.cdiv(B, even_steps))
    grid = (int(pl.cdiv(B, TB)),)

    io_aliases = {0: 0} if donate_images else {}

    def run(single_buffer_bcast):
        if single_buffer_bcast:
            bcast_spec = pl.BlockSpec((R, LANE), lambda b: (0, 0),
                                      pipeline_mode=pl.Buffered(1))
        else:
            bcast_spec = pl.BlockSpec((R, LANE), lambda b: (0, 0))
        return pl.pallas_call(
            _attack_kernel,
            out_shape=jax.ShapeDtypeStruct((B, R, LANE), in_dtype),
            grid=grid,
            in_specs=[
                pl.BlockSpec((TB, R, LANE), lambda b: (b, 0, 0)),
                bcast_spec,
                bcast_spec,
            ],
            out_specs=pl.BlockSpec((TB, R, LANE), lambda b: (b, 0, 0)),
            input_output_aliases=io_aliases,
            compiler_params=pltpu.CompilerParams(
                dimension_semantics=("parallel",),
                vmem_limit_bytes=vmem_limit),
        )(img2d, mask2d, uap2d)

    if looks_v7x:
        try:
            out = run(True)     # single-buffer the constant-index broadcasts
        except Exception:
            out = run(False)    # fall back if Buffered(1) is unsupported
    else:
        out = run(False)

    out = out.reshape(B, padded)
    if pad:
        out = out[:, :total]
    return out.reshape(B, C, H, W)


# ---------------------------------------------------------------------------
# Reference (plain JAX) for sanity checking
# ---------------------------------------------------------------------------
def advclip_attack_ref(images, uap, mask):
    if images.ndim == 3:
        images = images[None]
    B, C, H, W = images.shape
    if H != uap.shape[2] or W != uap.shape[3]:
        uap = jax.image.resize(uap, (1, C, H, W), method='linear')
        mask = jax.image.resize(mask, (1, C, H, W), method='linear')
    x = (1.0 - mask) * images.astype(jnp.float32) + mask * uap
    return jnp.clip(x, 0.0, 1.0).astype(images.dtype)


if __name__ == "__main__":
    key = jax.random.PRNGKey(0)
    uap, mask = init_advclip_params(seed=0)

    # 1) Native 224x224 path (no interpolation) — matches the module default.
    images = jax.random.uniform(key, (2, 3, 224, 224), dtype=jnp.float32)
    out = jax.block_until_ready(advclip_attack_pallas(images, uap, mask))
    ref = advclip_attack_ref(images, uap, mask)
    np.testing.assert_allclose(np.asarray(out), np.asarray(ref),
                               rtol=1e-6, atol=1e-6)
    assert out.shape == images.shape and out.dtype == images.dtype

    # 2) Smaller images (triggers bilinear resize of uap/mask); flattened
    #    length is a multiple of 128 -> no padding needed.
    small = jax.random.uniform(jax.random.PRNGKey(1), (2, 3, 64, 64),
                               dtype=jnp.float32)
    with warnings.catch_warnings():
        warnings.simplefilter("ignore")
        out2 = jax.block_until_ready(advclip_attack_pallas(small, uap, mask))
    ref2 = advclip_attack_ref(small, uap, mask)
    np.testing.assert_allclose(np.asarray(out2), np.asarray(ref2),
                               rtol=1e-6, atol=1e-6)

    # 3) Awkward spatial size (flattened length NOT a multiple of 128):
    #    exercises the lane-padded fallback layout.
    odd = jax.random.uniform(jax.random.PRNGKey(2), (2, 3, 40, 40),
                             dtype=jnp.float32)
    with warnings.catch_warnings():
        warnings.simplefilter("ignore")
        out3 = jax.block_until_ready(advclip_attack_pallas(odd, uap, mask))
    ref3 = advclip_attack_ref(odd, uap, mask)
    np.testing.assert_allclose(np.asarray(out3), np.asarray(ref3),
                               rtol=1e-6, atol=1e-6)

    print("KERNEL_OK")
</pallas_src>

<mosaic_0001>
module attributes {stable_mosaic.version = 11 : i64} {
  func.func @_attack_kernel(%arg0: i32, %arg1: memref<2x1176x128xf32, #tpu.memory_space<vmem>>, %arg2: memref<1176x128xf32, #tpu.memory_space<vmem>>, %arg3: memref<1176x128xf32, #tpu.memory_space<vmem>>, %arg4: memref<2x1176x128xf32, #tpu.memory_space<vmem>>) attributes {dimension_semantics = [#tpu.dimension_semantics<parallel>], iteration_bounds = array<i64: 1>, scalar_prefetch = 0 : i64, scratch_operands = 0 : i64, tpu.core_type = #tpu.core_type<tc>, window_params = [{transform_indices = @transform_0, window_bounds = array<i64: 2, 1176, 128>}, {pipeline_mode = #tpu.pipeline_mode<synchronous>, transform_indices = @transform_1, window_bounds = array<i64: 1176, 128>}, {pipeline_mode = #tpu.pipeline_mode<synchronous>, transform_indices = @transform_2, window_bounds = array<i64: 1176, 128>}, {transform_indices = @transform_3, window_bounds = array<i64: 2, 1176, 128>}]} {
    %c0 = arith.constant 0 : index
    %c0_0 = arith.constant 0 : index
    %c0_1 = arith.constant 0 : index
    %0 = vector.load %arg1[%c0, %c0_0, %c0_1] : memref<2x1176x128xf32, #tpu.memory_space<vmem>>, vector<2x1176x128xf32>
    %c0_2 = arith.constant 0 : index
    %c0_3 = arith.constant 0 : index
    %1 = vector.load %arg2[%c0_2, %c0_3] : memref<1176x128xf32, #tpu.memory_space<vmem>>, vector<1176x128xf32>
    %c0_4 = arith.constant 0 : index
    %c0_5 = arith.constant 0 : index
    %2 = vector.load %arg3[%c0_4, %c0_5] : memref<1176x128xf32, #tpu.memory_space<vmem>>, vector<1176x128xf32>
    %cst = arith.constant 1.000000e+00 : f32
    %3 = vector.broadcast %cst : f32 to vector<1176x128xf32>
    %4 = arith.subf %3, %1 : vector<1176x128xf32>
    %5 = vector.shape_cast %4 : vector<1176x128xf32> to vector<1x1176x128xf32>
    %6 = vector.broadcast %5 : vector<1x1176x128xf32> to vector<2x1176x128xf32>
    %7 = arith.mulf %6, %0 : vector<2x1176x128xf32>
    %8 = arith.mulf %1, %2 : vector<1176x128xf32>
    %9 = vector.shape_cast %8 : vector<1176x128xf32> to vector<1x1176x128xf32>
    %10 = vector.broadcast %9 : vector<1x1176x128xf32> to vector<2x1176x128xf32>
    %11 = arith.addf %7, %10 : vector<2x1176x128xf32>
    %cst_6 = arith.constant 0.000000e+00 : f32
    %cst_7 = arith.constant 1.000000e+00 : f32
    %12 = vector.broadcast %cst_6 : f32 to vector<2x1176x128xf32>
    %13 = arith.maximumf %12, %11 : vector<2x1176x128xf32>
    %14 = vector.broadcast %cst_7 : f32 to vector<2x1176x128xf32>
    %15 = arith.minimumf %14, %13 : vector<2x1176x128xf32>
    %c0_8 = arith.constant 0 : index
    %c0_9 = arith.constant 0 : index
    %c0_10 = arith.constant 0 : index
    %16 = vector.load %arg4[%c0_8, %c0_9, %c0_10] : memref<2x1176x128xf32, #tpu.memory_space<vmem>>, vector<2x1176x128xf32>
    tpu.vector_store %arg4[%c0_8, %c0_9, %c0_10], %15 {strides = array<i32>} : memref<2x1176x128xf32, #tpu.memory_space<vmem>>, vector<2x1176x128xf32>,
    return
  }
  func.func @transform_0(%arg0: i32) -> (i32, i32, i32) {
    %c0_i32 = arith.constant 0 : i32
    %c0_i32_0 = arith.constant 0 : i32
    %c0_i32_1 = arith.constant 0 : i32
    return %arg0, %c0_i32, %c0_i32_0 : i32, i32, i32
  }
  func.func @transform_1(%arg0: i32) -> (i32, i32) {
    %c0_i32 = arith.constant 0 : i32
    %c0_i32_0 = arith.constant 0 : i32
    %c0_i32_1 = arith.constant 0 : i32
    return %c0_i32, %c0_i32_0 : i32, i32
  }
  func.func @transform_2(%arg0: i32) -> (i32, i32) {
    %c0_i32 = arith.constant 0 : i32
    %c0_i32_0 = arith.constant 0 : i32
    %c0_i32_1 = arith.constant 0 : i32
    return %c0_i32, %c0_i32_0 : i32, i32
  }
  func.func @transform_3(%arg0: i32) -> (i32, i32, i32) {
    %c0_i32 = arith.constant 0 : i32
    %c0_i32_0 = arith.constant 0 : i32
    %c0_i32_1 = arith.constant 0 : i32
    return %arg0, %c0_i32, %c0_i32_0 : i32, i32, i32
  }
}

</mosaic_0001>

<llo_original>
// kernel: tpu_custom_call.1
$region0: #{tpu_custom_call.1}
  #allocation0 [shape = 'u32[]', space=smem, size = 0x4, offset = 0x4, fixed_abs, tag = 'smem constant byte address 0x4 - core index']
  #allocation1 [shape = 'u32[72,128]{1,0:T(1,128)}', space=vmem, size = 0x9000, scoped, tag = 'internal scratch']
  %s0 = inlined_call_operand.hbm [shape: f32[2,1176,128], index: 0, kind: input, shape index: {}]
  %s1 = inlined_call_operand.hbm [shape: f32[1176,128], index: 1, kind: input, shape index: {}]
  %s2 = inlined_call_operand.hbm [shape: f32[1176,128], index: 2, kind: input, shape index: {}]
  %s3 = inlined_call_operand.hbm [shape: f32[2,1176,128], index: 3, kind: output, shape index: {}]
  %s4 = sld [smem:[#allocation0]]
  $region34: #{tpu_custom_call.1} parent=0
    _
  %s6 = ssub.s32 1, %s4
  %s7 = scalar_select 0, %s6, %s4
  $region1: #{tpu_custom_call.1} parent=0
    #allocation2 [shape = 'u8[1204224]{0}', space=vmem, size = 0x126000, scoped, tag = 'input window, operand 0, single buffered']
    #allocation3 [shape = 's32[1]{0}', space=sflag, size = 0x4, scoped, tag = 'scoped memory for tpu_custom_call.1']
    #allocation4 [shape = 's32[1]{0}', space=sflag, size = 0x4, scoped, tag = 'scoped memory for tpu_custom_call.1']
    #allocation5 [shape = 'u8[602112]{0}', space=vmem, size = 0x93000, scoped, tag = 'input window, operand 1, single buffered']
    #allocation6 [shape = 's32[1]{0}', space=sflag, size = 0x4, scoped, tag = 'scoped memory for tpu_custom_call.1']
    #allocation7 [shape = 'u8[602112]{0}', space=vmem, size = 0x93000, scoped, tag = 'input window, operand 2, single buffered']
    #allocation8 [shape = 'u8[1204224]{0}', space=vmem, size = 0x126000, scoped, tag = 'output window, operand 0, single buffered']
    %8 = vsyncpa [#allocation3], 0
    %9 = vsyncpa [#allocation6], 0
    %10 = vsyncpa [#allocation4], 0
    // Predicated region
    $region2: #{tpu_custom_call.1} parent=1 // pred_check
      _
    $region3: #{tpu_custom_call.1} parent=1 // pred_check_branch
      %12 = sbr.rel (0) target = $region5
    $region4: #{tpu_custom_call.1} parent=1 // pred_region
      %14 = vsyncadd [#allocation3], 0
      %s15 = sshll.u32 %s0, 4
      %s16 = int_to_ptr.hbm [resolvable:$true] %s15
      %s17 = sshll.u32 [#allocation2], 4
      %s18 = int_to_ptr.vmem [resolvable:$true] %s17
      %23 = dma.hbm_to_vmem [thread:$0]  %s16, 37632, %s18, [#allocation3], 128, 128, 8
    $region5: #{tpu_custom_call.1} parent=1 // pred_fallthru
      _
    // Predicated region
    $region6: #{tpu_custom_call.1} parent=1 // pred_check
      _
    $region7: #{tpu_custom_call.1} parent=1 // pred_check_branch
      %25 = sbr.rel (0) target = $region9
    $region8: #{tpu_custom_call.1} parent=1 // pred_region
      %27 = vsyncadd [#allocation6], 0
      %s28 = sshll.u32 %s1, 4
      %s29 = int_to_ptr.hbm [resolvable:$true] %s28
      %s30 = sshll.u32 [#allocation5], 4
      %s31 = int_to_ptr.vmem [resolvable:$true] %s30
      %36 = dma.hbm_to_vmem [thread:$0]  %s29, 18816, %s31, [#allocation6], 128, 128, 8
    $region9: #{tpu_custom_call.1} parent=1 // pred_fallthru
      _
    // Predicated region
    $region10: #{tpu_custom_call.1} parent=1 // pred_check
      _
    $region11: #{tpu_custom_call.1} parent=1 // pred_check_branch
      %38 = sbr.rel (0) target = $region13
    $region12: #{tpu_custom_call.1} parent=1 // pred_region
      %40 = vsyncadd [#allocation6], 0
      %s41 = sshll.u32 %s2, 4
      %s42 = int_to_ptr.hbm [resolvable:$true] %s41
      %s43 = sshll.u32 [#allocation7], 4
      %s44 = int_to_ptr.vmem [resolvable:$true] %s43
      %49 = dma.hbm_to_vmem [thread:$0]  %s42, 18816, %s44, [#allocation6], 128, 128, 8
    $region13: #{tpu_custom_call.1} parent=1 // pred_fallthru
      _
    // Predicated region
    $region14: #{tpu_custom_call.1} parent=1 // pred_check
      _
    $region15: #{tpu_custom_call.1} parent=1 // pred_check_branch
      %51 = sbr.rel (0) target = $region17
    $region16: #{tpu_custom_call.1} parent=1 // pred_region
      %53 = dma.done [#allocation3], 37632
    $region17: #{tpu_custom_call.1} parent=1 // pred_fallthru
      _
    // Predicated region
    $region18: #{tpu_custom_call.1} parent=1 // pred_check
      _
    $region19: #{tpu_custom_call.1} parent=1 // pred_check_branch
      %55 = sbr.rel (0) target = $region21
    $region20: #{tpu_custom_call.1} parent=1 // pred_region
      %57 = dma.done [#allocation6], 18816
    $region21: #{tpu_custom_call.1} parent=1 // pred_fallthru
      _
    // Predicated region
    $region22: #{tpu_custom_call.1} parent=1 // pred_check
      _
    $region23: #{tpu_custom_call.1} parent=1 // pred_check_branch
      %59 = sbr.rel (0) target = $region25
    $region24: #{tpu_custom_call.1} parent=1 // pred_region
      %61 = dma.done [#allocation6], 18816
    $region25: #{tpu_custom_call.1} parent=1 // pred_fallthru
      _
    %v62 = vld [vmem:[#allocation2] sm:$0xff]
    %v63 = vld [vmem:[#allocation2 + $0x8] sm:$0xff]
    %v64 = vld [vmem:[#allocation2 + $0x10] sm:$0xff]
    %v65 = vld [vmem:[#allocation2 + $0x18] sm:$0xff]
    %v66 = vld [vmem:[#allocation2 + $0x20] sm:$0xff]
    %v67 = vld [vmem:[#allocation2 + $0x28] sm:$0xff]
    %v68 = vld [vmem:[#allocation2 + $0x30] sm:$0xff]
    %v69 = vld [vmem:[#allocation2 + $0x38] sm:$0xff]
    %v70 = vld [vmem:[#allocation2 + $0x40] sm:$0xff]
    %v71 = vld [vmem:[#allocation2 + $0x48] sm:$0xff]
    %v72 = vld [vmem:[#allocation2 + $0x50] sm:$0xff]
    %v73 = vld [vmem:[#allocation2 + $0x58] sm:$0xff]
    %v74 = vld [vmem:[#allocation2 + $0x60] sm:$0xff]
    %v75 = vld [vmem:[#allocation2 + $0x68] sm:$0xff]
    %v76 = vld [vmem:[#allocation2 + $0x70] sm:$0xff]
    %v77 = vld [vmem:[#allocation2 + $0x78] sm:$0xff]
    %v78 = vld [vmem:[#allocation2 + $0x80] sm:$0xff]
    %v79 = vld [vmem:[#allocation2 + $0x88] sm:$0xff]
    %v80 = vld [vmem:[#allocation2 + $0x90] sm:$0xff]
    %v81 = vld [vmem:[#allocation2 + $0x98] sm:$0xff]
    %v82 = vld [vmem:[#allocation2 + $0xa0] sm:$0xff]
    %v83 = vld [vmem:[#allocation2 + $0xa8] sm:$0xff]
    %v84 = vld [vmem:[#allocation2 + $0xb0] sm:$0xff]
    %v85 = vld [vmem:[#allocation2 + $0xb8] sm:$0xff]
    %v86 = vld [vmem:[#allocation2 + $0xc0] sm:$0xff]
    %v87 = vld [vmem:[#allocation2 + $0xc8] sm:$0xff]
    %v88 = vld [vmem:[#allocation2 + $0xd0] sm:$0xff]
    %v89 = vld [vmem:[#allocation2 + $0xd8] sm:$0xff]
    %v90 = vld [vmem:[#allocation2 + $0xe0] sm:$0xff]
    %v91 = vld [vmem:[#allocation2 + $0xe8] sm:$0xff]
    %v92 = vld [vmem:[#allocation2 + $0xf0] sm:$0xff]
    %v93 = vld [vmem:[#allocation2 + $0xf8] sm:$0xff]
    %v94 = vld [vmem:[#allocation2 + $0x100] sm:$0xff]
    %v95 = vld [vmem:[#allocation2 + $0x108] sm:$0xff]
    %v96 = vld [vmem:[#allocation2 + $0x110] sm:$0xff]
    %v97 = vld [vmem:[#allocation2 + $0x118] sm:$0xff]
    %v98 = vld [vmem:[#allocation2 + $0x120] sm:$0xff]
    %v99 = vld [vmem:[#allocation2 + $0x128] sm:$0xff]
    %v100 = vld [vmem:[#allocation2 + $0x130] sm:$0xff]
    %v101 = vld [vmem:[#allocation2 + $0x138] sm:$0xff]
    %v102 = vld [vmem:[#allocation2 + $0x140] sm:$0xff]
    %v103 = vld [vmem:[#allocation2 + $0x148] sm:$0xff]
    %v104 = vld [vmem:[#allocation2 + $0x150] sm:$0xff]
    %v105 = vld [vmem:[#allocation2 + $0x158] sm:$0xff]
    %v106 = vld [vmem:[#allocation2 + $0x160] sm:$0xff]
    %v107 = vld [vmem:[#allocation2 + $0x168] sm:$0xff]
    %v108 = vld [vmem:[#allocation2 + $0x170] sm:$0xff]
    %v109 = vld [vmem:[#allocation2 + $0x178] sm:$0xff]
    %v110 = vld [vmem:[#allocation2 + $0x180] sm:$0xff]
    %v111 = vld [vmem:[#allocation2 + $0x188] sm:$0xff]
    %v112 = vld [vmem:[#allocation2 + $0x190] sm:$0xff]
    %v113 = vld [vmem:[#allocation2 + $0x198] sm:$0xff]
    %v114 = vld [vmem:[#allocation2 + $0x1a0] sm:$0xff]
    %v115 = vld [vmem:[#allocation2 + $0x1a8] sm:$0xff]
    %v116 = vld [vmem:[#allocation2 + $0x1b0] sm:$0xff]
    %v117 = vld [vmem:[#allocation2 + $0x1b8] sm:$0xff]
    %v118 = vld [vmem:[#allocation2 + $0x1c0] sm:$0xff]
    %v119 = vld [vmem:[#allocation2 + $0x1c8] sm:$0xff]
    %v120 = vld [vmem:[#allocation2 + $0x1d0] sm:$0xff]
    %v121 = vld [vmem:[#allocation2 + $0x1d8] sm:$0xff]
    %v122 = vld [vmem:[#allocation2 + $0x1e0] sm:$0xff]
    %v123 = vld [vmem:[#allocation2 + $0x1e8] sm:$0xff]
    %v124 = vld [vmem:[#allocation2 + $0x1f0] sm:$0xff]
    %v125 = vld [vmem:[#allocation2 + $0x1f8] sm:$0xff]
    %v126 = vld [vmem:[#allocation2 + $0x200] sm:$0xff]
    %v127 = vld [vmem:[#allocation2 + $0x208] sm:$0xff]
    %v128 = vld [vmem:[#allocation2 + $0x210] sm:$0xff]
    %v129 = vld [vmem:[#allocation2 + $0x218] sm:$0xff]
    %v130 = vld [vmem:[#allocation2 + $0x220] sm:$0xff]
    %v131 = vld [vmem:[#allocation2 + $0x228] sm:$0xff]
    %v132 = vld [vmem:[#allocation2 + $0x230] sm:$0xff]
    %v133 = vld [vmem:[#allocation2 + $0x238] sm:$0xff]
    %v134 = vld [vmem:[#allocation2 + $0x240] sm:$0xff]
    %v135 = vld [vmem:[#allocation2 + $0x248] sm:$0xff]
    %v136 = vld [vmem:[#allocation2 + $0x250] sm:$0xff]
    %v137 = vld [vmem:[#allocation2 + $0x258] sm:$0xff]
    %v138 = vld [vmem:[#allocation2 + $0x260] sm:$0xff]
    %v139 = vld [vmem:[#allocation2 + $0x268] sm:$0xff]
    %v140 = vld [vmem:[#allocation2 + $0x270] sm:$0xff]
    %v141 = vld [vmem:[#allocation2 + $0x278] sm:$0xff]
    %v142 = vld [vmem:[#allocation2 + $0x280] sm:$0xff]
    %v143 = vld [vmem:[#allocation2 + $0x288] sm:$0xff]
    %v144 = vld [vmem:[#allocation2 + $0x290] sm:$0xff]
    %v145 = vld [vmem:[#allocation2 + $0x298] sm:$0xff]
    %v146 = vld [vmem:[#allocation2 + $0x2a0] sm:$0xff]
    %v147 = vld [vmem:[#allocation2 + $0x2a8] sm:$0xff]
    %v148 = vld [vmem:[#allocation2 + $0x2b0] sm:$0xff]
    %v149 = vld [vmem:[#allocation2 + $0x2b8] sm:$0xff]
    %v150 = vld [vmem:[#allocation2 + $0x2c0] sm:$0xff]
    %v151 = vld [vmem:[#allocation2 + $0x2c8] sm:$0xff]
    %v152 = vld [vmem:[#allocation2 + $0x2d0] sm:$0xff]
    %v153 = vld [vmem:[#allocation2 + $0x2d8] sm:$0xff]
    %v154 = vld [vmem:[#allocation2 + $0x2e0] sm:$0xff]
    %v155 = vld [vmem:[#allocation2 + $0x2e8] sm:$0xff]
    %v156 = vld [vmem:[#allocation2 + $0x2f0] sm:$0xff]
    %v157 = vld [vmem:[#allocation2 + $0x2f8] sm:$0xff]
    %v158 = vld [vmem:[#allocation2 + $0x300] sm:$0xff]
    %v159 = vld [vmem:[#allocation2 + $0x308] sm:$0xff]
    %v160 = vld [vmem:[#allocation2 + $0x310] sm:$0xff]
    %v161 = vld [vmem:[#allocation2 + $0x318] sm:$0xff]
    %v162 = vld [vmem:[#allocation2 + $0x320] sm:$0xff]
    %v163 = vld [vmem:[#allocation2 + $0x328] sm:$0xff]
    %v164 = vld [vmem:[#allocation2 + $0x330] sm:$0xff]
    %v165 = vld [vmem:[#allocation2 + $0x338] sm:$0xff]
    %v166 = vld [vmem:[#allocation2 + $0x340] sm:$0xff]
    %v167 = vld [vmem:[#allocation2 + $0x348] sm:$0xff]
    %v168 = vld [vmem:[#allocation2 + $0x350] sm:$0xff]
    %v169 = vld [vmem:[#allocation2 + $0x358] sm:$0xff]
    %v170 = vld [vmem:[#allocation2 + $0x360] sm:$0xff]
    %v171 = vld [vmem:[#allocation2 + $0x368] sm:$0xff]
    %v172 = vld [vmem:[#allocation2 + $0x370] sm:$0xff]
    %v173 = vld [vmem:[#allocation2 + $0x378] sm:$0xff]
    %v174 = vld [vmem:[#allocation2 + $0x380] sm:$0xff]
    %v175 = vld [vmem:[#allocation2 + $0x388] sm:$0xff]
    %v176 = vld [vmem:[#allocation2 + $0x390] sm:$0xff]
    %v177 = vld [vmem:[#allocation2 + $0x398] sm:$0xff]
    %v178 = vld [vmem:[#allocation2 + $0x3a0] sm:$0xff]
    %v179 = vld [vmem:[#allocation2 + $0x3a8] sm:$0xff]
    %v180 = vld [vmem:[#allocation2 + $0x3b0] sm:$0xff]
    %v181 = vld [vmem:[#allocation2 + $0x3b8] sm:$0xff]
    %v182 = vld [vmem:[#allocation2 + $0x3c0] sm:$0xff]
    %v183 = vld [vmem:[#allocation2 + $0x3c8] sm:$0xff]
    %v184 = vld [vmem:[#allocation2 + $0x3d0] sm:$0xff]
    %v185 = vld [vmem:[#allocation2 + $0x3d8] sm:$0xff]
    %v186 = vld [vmem:[#allocation2 + $0x3e0] sm:$0xff]
    %v187 = vld [vmem:[#allocation2 + $0x3e8] sm:$0xff]
    %v188 = vld [vmem:[#allocation2 + $0x3f0] sm:$0xff]
    %v189 = vld [vmem:[#allocation2 + $0x3f8] sm:$0xff]
    %v190 = vld [vmem:[#allocation2 + $0x400] sm:$0xff]
    %v191 = vld [vmem:[#allocation2 + $0x408] sm:$0xff]
    %v192 = vld [vmem:[#allocation2 + $0x410] sm:$0xff]
    %v193 = vld [vmem:[#allocation2 + $0x418] sm:$0xff]
    %v194 = vld [vmem:[#allocation2 + $0x420] sm:$0xff]
    %v195 = vld [vmem:[#allocation2 + $0x428] sm:$0xff]
    %v196 = vld [vmem:[#allocation2 + $0x430] sm:$0xff]
    %v197 = vld [vmem:[#allocation2 + $0x438] sm:$0xff]
    %v198 = vld [vmem:[#allocation2 + $0x440] sm:$0xff]
    %v199 = vld [vmem:[#allocation2 + $0x448] sm:$0xff]
    %v200 = vld [vmem:[#allocation2 + $0x450] sm:$0xff]
    %v201 = vld [vmem:[#allocation2 + $0x458] sm:$0xff]
    %v202 = vld [vmem:[#allocation2 + $0x460] sm:$0xff]
    %v203 = vld [vmem:[#allocation2 + $0x468] sm:$0xff]
    %v204 = vld [vmem:[#allocation2 + $0x470] sm:$0xff]
    %v205 = vld [vmem:[#allocation2 + $0x478] sm:$0xff]
    %v206 = vld [vmem:[#allocation2 + $0x480] sm:$0xff]
    %v207 = vld [vmem:[#allocation2 + $0x488] sm:$0xff]
    %v208 = vld [vmem:[#allocation2 + $0x490] sm:$0xff]
    %v209 = vld [vmem:[#allocation2 + $0x498] sm:$0xff]
    %v210 = vld [vmem:[#allocation2 + $0x4a0] sm:$0xff]
    %v211 = vld [vmem:[#allocation2 + $0x4a8] sm:$0xff]
    %v212 = vld [vmem:[#allocation2 + $0x4b0] sm:$0xff]
    %v213 = vld [vmem:[#allocation2 + $0x4b8] sm:$0xff]
    %v214 = vld [vmem:[#allocation2 + $0x4c0] sm:$0xff]
    %v215 = vld [vmem:[#allocation2 + $0x4c8] sm:$0xff]
    %v216 = vld [vmem:[#allocation2 + $0x4d0] sm:$0xff]
    %v217 = vld [vmem:[#allocation2 + $0x4d8] sm:$0xff]
    %v218 = vld [vmem:[#allocation2 + $0x4e0] sm:$0xff]
    %v219 = vld [vmem:[#allocation2 + $0x4e8] sm:$0xff]
    %v220 = vld [vmem:[#allocation2 + $0x4f0] sm:$0xff]
    %v221 = vld [vmem:[#allocation2 + $0x4f8] sm:$0xff]
    %v222 = vld [vmem:[#allocation2 + $0x500] sm:$0xff]
    %v223 = vld [vmem:[#allocation2 + $0x508] sm:$0xff]
    %v224 = vld [vmem:[#allocation2 + $0x510] sm:$0xff]
    %v225 = vld [vmem:[#allocation2 + $0x518] sm:$0xff]
    %v226 = vld [vmem:[#allocation2 + $0x520] sm:$0xff]
    %v227 = vld [vmem:[#allocation2 + $0x528] sm:$0xff]
    %v228 = vld [vmem:[#allocation2 + $0x530] sm:$0xff]
    %v229 = vld [vmem:[#allocation2 + $0x538] sm:$0xff]
    %v230 = vld [vmem:[#allocation2 + $0x540] sm:$0xff]
    %v231 = vld [vmem:[#allocation2 + $0x548] sm:$0xff]
    %v232 = vld [vmem:[#allocation2 + $0x550] sm:$0xff]
    %v233 = vld [vmem:[#allocation2 + $0x558] sm:$0xff]
    %v234 = vld [vmem:[#allocation2 + $0x560] sm:$0xff]
    %v235 = vld [vmem:[#allocation2 + $0x568] sm:$0xff]
    %v236 = vld [vmem:[#allocation2 + $0x570] sm:$0xff]
    %v237 = vld [vmem:[#allocation2 + $0x578] sm:$0xff]
    %v238 = vld [vmem:[#allocation2 + $0x580] sm:$0xff]
    %v239 = vld [vmem:[#allocation2 + $0x588] sm:$0xff]
    %v240 = vld [vmem:[#allocation2 + $0x590] sm:$0xff]
    %v241 = vld [vmem:[#allocation2 + $0x598] sm:$0xff]
    %v242 = vld [vmem:[#allocation2 + $0x5a0] sm:$0xff]
    %v243 = vld [vmem:[#allocation2 + $0x5a8] sm:$0xff]
    %v244 = vld [vmem:[#allocation2 + $0x5b0] sm:$0xff]
    %v245 = vld [vmem:[#allocation2 + $0x5b8] sm:$0xff]
    %v246 = vld [vmem:[#allocation2 + $0x5c0] sm:$0xff]
    %v247 = vld [vmem:[#allocation2 + $0x5c8] sm:$0xff]
    %v248 = vld [vmem:[#allocation2 + $0x5d0] sm:$0xff]
    %v249 = vld [vmem:[#allocation2 + $0x5d8] sm:$0xff]
    %v250 = vld [vmem:[#allocation2 + $0x5e0] sm:$0xff]
    %v251 = vld [vmem:[#allocation2 + $0x5e8] sm:$0xff]
    %v252 = vld [vmem:[#allocation2 + $0x5f0] sm:$0xff]
    %v253 = vld [vmem:[#allocation2 + $0x5f8] sm:$0xff]
    %v254 = vld [vmem:[#allocation2 + $0x600] sm:$0xff]
    %v255 = vld [vmem:[#allocation2 + $0x608] sm:$0xff]
    %v256 = vld [vmem:[#allocation2 + $0x610] sm:$0xff]
    %v257 = vld [vmem:[#allocation2 + $0x618] sm:$0xff]
    %v258 = vld [vmem:[#allocation2 + $0x620] sm:$0xff]
    %v259 = vld [vmem:[#allocation2 + $0x628] sm:$0xff]
    %v260 = vld [vmem:[#allocation2 + $0x630] sm:$0xff]
    %v261 = vld [vmem:[#allocation2 + $0x638] sm:$0xff]
    %v262 = vld [vmem:[#allocation2 + $0x640] sm:$0xff]
    %v263 = vld [vmem:[#allocation2 + $0x648] sm:$0xff]
    %v264 = vld [vmem:[#allocation2 + $0x650] sm:$0xff]
    %v265 = vld [vmem:[#allocation2 + $0x658] sm:$0xff]
    %v266 = vld [vmem:[#allocation2 + $0x660] sm:$0xff]
    %v267 = vld [vmem:[#allocation2 + $0x668] sm:$0xff]
    %v268 = vld [vmem:[#allocation2 + $0x670] sm:$0xff]
    %v269 = vld [vmem:[#allocation2 + $0x678] sm:$0xff]
    %v270 = vld [vmem:[#allocation2 + $0x680] sm:$0xff]
    %v271 = vld [vmem:[#allocation2 + $0x688] sm:$0xff]
    %v272 = vld [vmem:[#allocation2 + $0x690] sm:$0xff]
    %v273 = vld [vmem:[#allocation2 + $0x698] sm:$0xff]
    %v274 = vld [vmem:[#allocation2 + $0x6a0] sm:$0xff]
    %v275 = vld [vmem:[#allocation2 + $0x6a8] sm:$0xff]
    %v276 = vld [vmem:[#allocation2 + $0x6b0] sm:$0xff]
    %v277 = vld [vmem:[#allocation2 + $0x6b8] sm:$0xff]
    %v278 = vld [vmem:[#allocation2 + $0x6c0] sm:$0xff]
    %v279 = vld [vmem:[#allocation2 + $0x6c8] sm:$0xff]
    %v280 = vld [vmem:[#allocation2 + $0x6d0] sm:$0xff]
    %v281 = vld [vmem:[#allocation2 + $0x6d8] sm:$0xff]
    %v282 = vld [vmem:[#allocation2 + $0x6e0] sm:$0xff]
    %v283 = vld [vmem:[#allocation2 + $0x6e8] sm:$0xff]
    %v284 = vld [vmem:[#allocation2 + $0x6f0] sm:$0xff]
    %v285 = vld [vmem:[#allocation2 + $0x6f8] sm:$0xff]
    %v286 = vld [vmem:[#allocation2 + $0x700] sm:$0xff]
    %v287 = vld [vmem:[#allocation2 + $0x708] sm:$0xff]
    %v288 = vld [vmem:[#allocation2 + $0x710] sm:$0xff]
    %v289 = vld [vmem:[#allocation2 + $0x718] sm:$0xff]
    %v290 = vld [vmem:[#allocation2 + $0x720] sm:$0xff]
    %v291 = vld [vmem:[#allocation2 + $0x728] sm:$0xff]
    %v292 = vld [vmem:[#allocation2 + $0x730] sm:$0xff]
    %v293 = vld [vmem:[#allocation2 + $0x738] sm:$0xff]
    %v294 = vld [vmem:[#allocation2 + $0x740] sm:$0xff]
    %v295 = vld [vmem:[#allocation2 + $0x748] sm:$0xff]
    %v296 = vld [vmem:[#allocation2 + $0x750] sm:$0xff]
    %v297 = vld [vmem:[#allocation2 + $0x758] sm:$0xff]
    %v298 = vld [vmem:[#allocation2 + $0x760] sm:$0xff]
    %v299 = vld [vmem:[#allocation2 + $0x768] sm:$0xff]
    %v300 = vld [vmem:[#allocation2 + $0x770] sm:$0xff]
    %v301 = vld [vmem:[#allocation2 + $0x778] sm:$0xff]
    %v302 = vld [vmem:[#allocation2 + $0x780] sm:$0xff]
    %v303 = vld [vmem:[#allocation2 + $0x788] sm:$0xff]
    %v304 = vld [vmem:[#allocation2 + $0x790] sm:$0xff]
    %v305 = vld [vmem:[#allocation2 + $0x798] sm:$0xff]
    %v306 = vld [vmem:[#allocation2 + $0x7a0] sm:$0xff]
    %v307 = vld [vmem:[#allocation2 + $0x7a8] sm:$0xff]
    %v308 = vld [vmem:[#allocation2 + $0x7b0] sm:$0xff]
    %v309 = vld [vmem:[#allocation2 + $0x7b8] sm:$0xff]
    %v310 = vld [vmem:[#allocation2 + $0x7c0] sm:$0xff]
    %v311 = vld [vmem:[#allocation2 + $0x7c8] sm:$0xff]
    %v312 = vld [vmem:[#allocation2 + $0x7d0] sm:$0xff]
    %v313 = vld [vmem:[#allocation2 + $0x7d8] sm:$0xff]
    %v314 = vld [vmem:[#allocation2 + $0x7e0] sm:$0xff]
    %v315 = vld [vmem:[#allocation2 + $0x7e8] sm:$0xff]
    %v316 = vld [vmem:[#allocation2 + $0x7f0] sm:$0xff]
    %v317 = vld [vmem:[#allocation2 + $0x7f8] sm:$0xff]
    %v318 = vld [vmem:[#allocation2 + $0x800] sm:$0xff]
    %v319 = vld [vmem:[#allocation2 + $0x808] sm:$0xff]
    %v320 = vld [vmem:[#allocation2 + $0x810] sm:$0xff]
    %v321 = vld [vmem:[#allocation2 + $0x818] sm:$0xff]
    %v322 = vld [vmem:[#allocation2 + $0x820] sm:$0xff]
    %v323 = vld [vmem:[#allocation2 + $0x828] sm:$0xff]
    %v324 = vld [vmem:[#allocation2 + $0x830] sm:$0xff]
    %v325 = vld [vmem:[#allocation2 + $0x838] sm:$0xff]
    %v326 = vld [vmem:[#allocation2 + $0x840] sm:$0xff]
    %v327 = vld [vmem:[#allocation2 + $0x848] sm:$0xff]
    %v328 = vld [vmem:[#allocation2 + $0x850] sm:$0xff]
    %v329 = vld [vmem:[#allocation2 + $0x858] sm:$0xff]
    %v330 = vld [vmem:[#allocation2 + $0x860] sm:$0xff]
    %v331 = vld [vmem:[#allocation2 + $0x868] sm:$0xff]
    %v332 = vld [vmem:[#allocation2 + $0x870] sm:$0xff]
    %v333 = vld [vmem:[#allocation2 + $0x878] sm:$0xff]
    %v334 = vld [vmem:[#allocation2 + $0x880] sm:$0xff]
    %v335 = vld [vmem:[#allocation2 + $0x888] sm:$0xff]
    %v336 = vld [vmem:[#allocation2 + $0x890] sm:$0xff]
    %v337 = vld [vmem:[#allocation2 + $0x898] sm:$0xff]
    %v338 = vld [vmem:[#allocation2 + $0x8a0] sm:$0xff]
    %v339 = vld [vmem:[#allocation2 + $0x8a8] sm:$0xff]
    %v340 = vld [vmem:[#allocation2 + $0x8b0] sm:$0xff]
    %v341 = vld [vmem:[#allocation2 + $0x8b8] sm:$0xff]
    %v342 = vld [vmem:[#allocation2 + $0x8c0] sm:$0xff]
    %v343 = vld [vmem:[#allocation2 + $0x8c8] sm:$0xff]
    %v344 = vld [vmem:[#allocation2 + $0x8d0] sm:$0xff]
    %v345 = vld [vmem:[#allocation2 + $0x8d8] sm:$0xff]
    %v346 = vld [vmem:[#allocation2 + $0x8e0] sm:$0xff]
    %v347 = vld [vmem:[#allocation2 + $0x8e8] sm:$0xff]
    %v348 = vld [vmem:[#allocation2 + $0x8f0] sm:$0xff]
    %v349 = vld [vmem:[#allocation2 + $0x8f8] sm:$0xff]
    %v350 = vld [vmem:[#allocation2 + $0x900] sm:$0xff]
    %v351 = vld [vmem:[#allocation2 + $0x908] sm:$0xff]
    %v352 = vld [vmem:[#allocation2 + $0x910] sm:$0xff]
    %v353 = vld [vmem:[#allocation2 + $0x918] sm:$0xff]
    %v354 = vld [vmem:[#allocation2 + $0x920] sm:$0xff]
    %v355 = vld [vmem:[#allocation2 + $0x928] sm:$0xff]
    %v356 = vld [vmem:[#allocation5] sm:$0xff]
    %v357 = vld [vmem:[#allocation5 + $0x8] sm:$0xff]
    %v358 = vld [vmem:[#allocation5 + $0x10] sm:$0xff]
    %v359 = vld [vmem:[#allocation5 + $0x18] sm:$0xff]
    %v360 = vld [vmem:[#allocation5 + $0x20] sm:$0xff]
    %v361 = vld [vmem:[#allocation5 + $0x28] sm:$0xff]
    %v362 = vld [vmem:[#allocation5 + $0x30] sm:$0xff]
    %v363 = vld [vmem:[#allocation5 + $0x38] sm:$0xff]
    %v364 = vld [vmem:[#allocation5 + $0x40] sm:$0xff]
    %v365 = vld [vmem:[#allocation5 + $0x48] sm:$0xff]
    %v366 = vld [vmem:[#allocation5 + $0x50] sm:$0xff]
    %v367 = vld [vmem:[#allocation5 + $0x58] sm:$0xff]
    %v368 = vld [vmem:[#allocation5 + $0x60] sm:$0xff]
    %v369 = vld [vmem:[#allocation5 + $0x68] sm:$0xff]
    %v370 = vld [vmem:[#allocation5 + $0x70] sm:$0xff]
    %v371 = vld [vmem:[#allocation5 + $0x78] sm:$0xff]
    %v372 = vld [vmem:[#allocation5 + $0x80] sm:$0xff]
    %v373 = vld [vmem:[#allocation5 + $0x88] sm:$0xff]
    %v374 = vld [vmem:[#allocation5 + $0x90] sm:$0xff]
    %v375 = vld [vmem:[#allocation5 + $0x98] sm:$0xff]
    %v376 = vld [vmem:[#allocation5 + $0xa0] sm:$0xff]
    %v377 = vld [vmem:[#allocation5 + $0xa8] sm:$0xff]
    %v378 = vld [vmem:[#allocation5 + $0xb0] sm:$0xff]
    %v379 = vld [vmem:[#allocation5 + $0xb8] sm:$0xff]
    %v380 = vld [vmem:[#allocation5 + $0xc0] sm:$0xff]
    %v381 = vld [vmem:[#allocation5 + $0xc8] sm:$0xff]
    %v382 = vld [vmem:[#allocation5 + $0xd0] sm:$0xff]
    %v383 = vld [vmem:[#allocation5 + $0xd8] sm:$0xff]
    %v384 = vld [vmem:[#allocation5 + $0xe0] sm:$0xff]
    %v385 = vld [vmem:[#allocation5 + $0xe8] sm:$0xff]
    %v386 = vld [vmem:[#allocation5 + $0xf0] sm:$0xff]
    %v387 = vld [vmem:[#allocation5 + $0xf8] sm:$0xff]
    %v388 = vld [vmem:[#allocation5 + $0x100] sm:$0xff]
    %v389 = vld [vmem:[#allocation5 + $0x108] sm:$0xff]
    %v390 = vld [vmem:[#allocation5 + $0x110] sm:$0xff]
    %v391 = vld [vmem:[#allocation5 + $0x118] sm:$0xff]
    %v392 = vld [vmem:[#allocation5 + $0x120] sm:$0xff]
    %v393 = vld [vmem:[#allocation5 + $0x128] sm:$0xff]
    %v394 = vld [vmem:[#allocation5 + $0x130] sm:$0xff]
    %v395 = vld [vmem:[#allocation5 + $0x138] sm:$0xff]
    %v396 = vld [vmem:[#allocation5 + $0x140] sm:$0xff]
    %v397 = vld [vmem:[#allocation5 + $0x148] sm:$0xff]
    %v398 = vld [vmem:[#allocation5 + $0x150] sm:$0xff]
    %v399 = vld [vmem:[#allocation5 + $0x158] sm:$0xff]
    %v400 = vld [vmem:[#allocation5 + $0x160] sm:$0xff]
    %v401 = vld [vmem:[#allocation5 + $0x168] sm:$0xff]
    %v402 = vld [vmem:[#allocation5 + $0x170] sm:$0xff]
    %v403 = vld [vmem:[#allocation5 + $0x178] sm:$0xff]
    %v404 = vld [vmem:[#allocation5 + $0x180] sm:$0xff]
    %v405 = vld [vmem:[#allocation5 + $0x188] sm:$0xff]
    %v406 = vld [vmem:[#allocation5 + $0x190] sm:$0xff]
    %v407 = vld [vmem:[#allocation5 + $0x198] sm:$0xff]
    %v408 = vld [vmem:[#allocation5 + $0x1a0] sm:$0xff]
    %v409 = vld [vmem:[#allocation5 + $0x1a8] sm:$0xff]
    %v410 = vld [vmem:[#allocation5 + $0x1b0] sm:$0xff]
    %v411 = vld [vmem:[#allocation5 + $0x1b8] sm:$0xff]
    %v412 = vld [vmem:[#allocation5 + $0x1c0] sm:$0xff]
    %v413 = vld [vmem:[#allocation5 + $0x1c8] sm:$0xff]
    %v414 = vld [vmem:[#allocation5 + $0x1d0] sm:$0xff]
    %v415 = vld [vmem:[#allocation5 + $0x1d8] sm:$0xff]
    %v416 = vld [vmem:[#allocation5 + $0x1e0] sm:$0xff]
    %v417 = vld [vmem:[#allocation5 + $0x1e8] sm:$0xff]
    %v418 = vld [vmem:[#allocation5 + $0x1f0] sm:$0xff]
    %v419 = vld [vmem:[#allocation5 + $0x1f8] sm:$0xff]
    %v420 = vld [vmem:[#allocation5 + $0x200] sm:$0xff]
    %v421 = vld [vmem:[#allocation5 + $0x208] sm:$0xff]
    %v422 = vld [vmem:[#allocation5 + $0x210] sm:$0xff]
    %v423 = vld [vmem:[#allocation5 + $0x218] sm:$0xff]
    %v424 = vld [vmem:[#allocation5 + $0x220] sm:$0xff]
    %v425 = vld [vmem:[#allocation5 + $0x228] sm:$0xff]
    %v426 = vld [vmem:[#allocation5 + $0x230] sm:$0xff]
    %v427 = vld [vmem:[#allocation5 + $0x238] sm:$0xff]
    %v428 = vld [vmem:[#allocation5 + $0x240] sm:$0xff]
    %v429 = vld [vmem:[#allocation5 + $0x248] sm:$0xff]
    %v430 = vld [vmem:[#allocation5 + $0x250] sm:$0xff]
    %v431 = vld [vmem:[#allocation5 + $0x258] sm:$0xff]
    %v432 = vld [vmem:[#allocation5 + $0x260] sm:$0xff]
    %v433 = vld [vmem:[#allocation5 + $0x268] sm:$0xff]
    %v434 = vld [vmem:[#allocation5 + $0x270] sm:$0xff]
    %v435 = vld [vmem:[#allocation5 + $0x278] sm:$0xff]
    %v436 = vld [vmem:[#allocation5 + $0x280] sm:$0xff]
    %v437 = vld [vmem:[#allocation5 + $0x288] sm:$0xff]
    %v438 = vld [vmem:[#allocation5 + $0x290] sm:$0xff]
    %v439 = vld [vmem:[#allocation5 + $0x298] sm:$0xff]
    %v440 = vld [vmem:[#allocation5 + $0x2a0] sm:$0xff]
    %v441 = vld [vmem:[#allocation5 + $0x2a8] sm:$0xff]
    %v442 = vld [vmem:[#allocation5 + $0x2b0] sm:$0xff]
    %v443 = vld [vmem:[#allocation5 + $0x2b8] sm:$0xff]
    %v444 = vld [vmem:[#allocation5 + $0x2c0] sm:$0xff]
    %v445 = vld [vmem:[#allocation5 + $0x2c8] sm:$0xff]
    %v446 = vld [vmem:[#allocation5 + $0x2d0] sm:$0xff]
    %v447 = vld [vmem:[#allocation5 + $0x2d8] sm:$0xff]
    %v448 = vld [vmem:[#allocation5 + $0x2e0] sm:$0xff]
    %v449 = vld [vmem:[#allocation5 + $0x2e8] sm:$0xff]
    %v450 = vld [vmem:[#allocation5 + $0x2f0] sm:$0xff]
    %v451 = vld [vmem:[#allocation5 + $0x2f8] sm:$0xff]
    %v452 = vld [vmem:[#allocation5 + $0x300] sm:$0xff]
    %v453 = vld [vmem:[#allocation5 + $0x308] sm:$0xff]
    %v454 = vld [vmem:[#allocation5 + $0x310] sm:$0xff]
    %v455 = vld [vmem:[#allocation5 + $0x318] sm:$0xff]
    %v456 = vld [vmem:[#allocation5 + $0x320] sm:$0xff]
    %v457 = vld [vmem:[#allocation5 + $0x328] sm:$0xff]
    %v458 = vld [vmem:[#allocation5 + $0x330] sm:$0xff]
    %v459 = vld [vmem:[#allocation5 + $0x338] sm:$0xff]
    %v460 = vld [vmem:[#allocation5 + $0x340] sm:$0xff]
    %v461 = vld [vmem:[#allocation5 + $0x348] sm:$0xff]
    %v462 = vld [vmem:[#allocation5 + $0x350] sm:$0xff]
    %v463 = vld [vmem:[#allocation5 + $0x358] sm:$0xff]
    %v464 = vld [vmem:[#allocation5 + $0x360] sm:$0xff]
    %v465 = vld [vmem:[#allocation5 + $0x368] sm:$0xff]
    %v466 = vld [vmem:[#allocation5 + $0x370] sm:$0xff]
    %v467 = vld [vmem:[#allocation5 + $0x378] sm:$0xff]
    %v468 = vld [vmem:[#allocation5 + $0x380] sm:$0xff]
    %v469 = vld [vmem:[#allocation5 + $0x388] sm:$0xff]
    %v470 = vld [vmem:[#allocation5 + $0x390] sm:$0xff]
    %v471 = vld [vmem:[#allocation5 + $0x398] sm:$0xff]
    %v472 = vld [vmem:[#allocation5 + $0x3a0] sm:$0xff]
    %v473 = vld [vmem:[#allocation5 + $0x3a8] sm:$0xff]
    %v474 = vld [vmem:[#allocation5 + $0x3b0] sm:$0xff]
    %v475 = vld [vmem:[#allocation5 + $0x3b8] sm:$0xff]
    %v476 = vld [vmem:[#allocation5 + $0x3c0] sm:$0xff]
    %v477 = vld [vmem:[#allocation5 + $0x3c8] sm:$0xff]
    %v478 = vld [vmem:[#allocation5 + $0x3d0] sm:$0xff]
    %v479 = vld [vmem:[#allocation5 + $0x3d8] sm:$0xff]
    %v480 = vld [vmem:[#allocation5 + $0x3e0] sm:$0xff]
    %v481 = vld [vmem:[#allocation5 + $0x3e8] sm:$0xff]
    %v482 = vld [vmem:[#allocation5 + $0x3f0] sm:$0xff]
    %v483 = vld [vmem:[#allocation5 + $0x3f8] sm:$0xff]
    %v484 = vld [vmem:[#allocation5 + $0x400] sm:$0xff]
    %v485 = vld [vmem:[#allocation5 + $0x408] sm:$0xff]
    %v486 = vld [vmem:[#allocation5 + $0x410] sm:$0xff]
    %v487 = vld [vmem:[#allocation5 + $0x418] sm:$0xff]
    %v488 = vld [vmem:[#allocation5 + $0x420] sm:$0xff]
    %v489 = vld [vmem:[#allocation5 + $0x428] sm:$0xff]
    %v490 = vld [vmem:[#allocation5 + $0x430] sm:$0xff]
    %v491 = vld [vmem:[#allocation5 + $0x438] sm:$0xff]
    %v492 = vld [vmem:[#allocation5 + $0x440] sm:$0xff]
    %v493 = vld [vmem:[#allocation5 + $0x448] sm:$0xff]
    %v494 = vld [vmem:[#allocation5 + $0x450] sm:$0xff]
    %v495 = vld [vmem:[#allocation5 + $0x458] sm:$0xff]
    %v496 = vld [vmem:[#allocation5 + $0x460] sm:$0xff]
    %v497 = vld [vmem:[#allocation5 + $0x468] sm:$0xff]
    %v498 = vld [vmem:[#allocation5 + $0x470] sm:$0xff]
    %v499 = vld [vmem:[#allocation5 + $0x478] sm:$0xff]
    %v500 = vld [vmem:[#allocation5 + $0x480] sm:$0xff]
    %v501 = vld [vmem:[#allocation5 + $0x488] sm:$0xff]
    %v502 = vld [vmem:[#allocation5 + $0x490] sm:$0xff]
    %v503 = vld [vmem:[#allocation7] sm:$0xff]
    %v504 = vld [vmem:[#allocation7 + $0x8] sm:$0xff]
    %v505 = vld [vmem:[#allocation7 + $0x10] sm:$0xff]
    %v506 = vld [vmem:[#allocation7 + $0x18] sm:$0xff]
    %v507 = vld [vmem:[#allocation7 + $0x20] sm:$0xff]
    %v508 = vld [vmem:[#allocation7 + $0x28] sm:$0xff]
    %v509 = vld [vmem:[#allocation7 + $0x30] sm:$0xff]
    %v510 = vld [vmem:[#allocation7 + $0x38] sm:$0xff]
    %v511 = vld [vmem:[#allocation7 + $0x40] sm:$0xff]
    %v512 = vld [vmem:[#allocation7 + $0x48] sm:$0xff]
    %v513 = vld [vmem:[#allocation7 + $0x50] sm:$0xff]
    %v514 = vld [vmem:[#allocation7 + $0x58] sm:$0xff]
    %v515 = vld [vmem:[#allocation7 + $0x60] sm:$0xff]
    %v516 = vld [vmem:[#allocation7 + $0x68] sm:$0xff]
    %v517 = vld [vmem:[#allocation7 + $0x70] sm:$0xff]
    %v518 = vld [vmem:[#allocation7 + $0x78] sm:$0xff]
    %v519 = vld [vmem:[#allocation7 + $0x80] sm:$0xff]
    %v520 = vld [vmem:[#allocation7 + $0x88] sm:$0xff]
    %v521 = vld [vmem:[#allocation7 + $0x90] sm:$0xff]
    %v522 = vld [vmem:[#allocation7 + $0x98] sm:$0xff]
    %v523 = vld [vmem:[#allocation7 + $0xa0] sm:$0xff]
    %v524 = vld [vmem:[#allocation7 + $0xa8] sm:$0xff]
    %v525 = vld [vmem:[#allocation7 + $0xb0] sm:$0xff]
    %v526 = vld [vmem:[#allocation7 + $0xb8] sm:$0xff]
    %v527 = vld [vmem:[#allocation7 + $0xc0] sm:$0xff]
    %v528 = vld [vmem:[#allocation7 + $0xc8] sm:$0xff]
    %v529 = vld [vmem:[#allocation7 + $0xd0] sm:$0xff]
    %v530 = vld [vmem:[#allocation7 + $0xd8] sm:$0xff]
    %v531 = vld [vmem:[#allocation7 + $0xe0] sm:$0xff]
    %v532 = vld [vmem:[#allocation7 + $0xe8] sm:$0xff]
    %v533 = vld [vmem:[#allocation7 + $0xf0] sm:$0xff]
    %v534 = vld [vmem:[#allocation7 + $0xf8] sm:$0xff]
    %v535 = vld [vmem:[#allocation7 + $0x100] sm:$0xff]
    %v536 = vld [vmem:[#allocation7 + $0x108] sm:$0xff]
    %v537 = vld [vmem:[#allocation7 + $0x110] sm:$0xff]
    %v538 = vld [vmem:[#allocation7 + $0x118] sm:$0xff]
    %v539 = vld [vmem:[#allocation7 + $0x120] sm:$0xff]
    %v540 = vld [vmem:[#allocation7 + $0x128] sm:$0xff]
    %v541 = vld [vmem:[#allocation7 + $0x130] sm:$0xff]
    %v542 = vld [vmem:[#allocation7 + $0x138] sm:$0xff]
    %v543 = vld [vmem:[#allocation7 + $0x140] sm:$0xff]
    %v544 = vld [vmem:[#allocation7 + $0x148] sm:$0xff]
    %v545 = vld [vmem:[#allocation7 + $0x150] sm:$0xff]
    %v546 = vld [vmem:[#allocation7 + $0x158] sm:$0xff]
    %v547 = vld [vmem:[#allocation7 + $0x160] sm:$0xff]
    %v548 = vld [vmem:[#allocation7 + $0x168] sm:$0xff]
    %v549 = vld [vmem:[#allocation7 + $0x170] sm:$0xff]
    %v550 = vld [vmem:[#allocation7 + $0x178] sm:$0xff]
    %v551 = vld [vmem:[#allocation7 + $0x180] sm:$0xff]
    %v552 = vld [vmem:[#allocation7 + $0x188] sm:$0xff]
    %v553 = vld [vmem:[#allocation7 + $0x190] sm:$0xff]
    %v554 = vld [vmem:[#allocation7 + $0x198] sm:$0xff]
    %v555 = vld [vmem:[#allocation7 + $0x1a0] sm:$0xff]
    %v556 = vld [vmem:[#allocation7 + $0x1a8] sm:$0xff]
    %v557 = vld [vmem:[#allocation7 + $0x1b0] sm:$0xff]
    %v558 = vld [vmem:[#allocation7 + $0x1b8] sm:$0xff]
    %v559 = vld [vmem:[#allocation7 + $0x1c0] sm:$0xff]
    %v560 = vld [vmem:[#allocation7 + $0x1c8] sm:$0xff]
    %v561 = vld [vmem:[#allocation7 + $0x1d0] sm:$0xff]
    %v562 = vld [vmem:[#allocation7 + $0x1d8] sm:$0xff]
    %v563 = vld [vmem:[#allocation7 + $0x1e0] sm:$0xff]
    %v564 = vld [vmem:[#allocation7 + $0x1e8] sm:$0xff]
    %v565 = vld [vmem:[#allocation7 + $0x1f0] sm:$0xff]
    %v566 = vld [vmem:[#allocation7 + $0x1f8] sm:$0xff]
    %v567 = vld [vmem:[#allocation7 + $0x200] sm:$0xff]
    %v568 = vld [vmem:[#allocation7 + $0x208] sm:$0xff]
    %v569 = vld [vmem:[#allocation7 + $0x210] sm:$0xff]
    %v570 = vld [vmem:[#allocation7 + $0x218] sm:$0xff]
    %v571 = vld [vmem:[#allocation7 + $0x220] sm:$0xff]
    %v572 = vld [vmem:[#allocation7 + $0x228] sm:$0xff]
    %v573 = vld [vmem:[#allocation7 + $0x230] sm:$0xff]
    %v574 = vld [vmem:[#allocation7 + $0x238] sm:$0xff]
    %v575 = vld [vmem:[#allocation7 + $0x240] sm:$0xff]
    %v576 = vld [vmem:[#allocation7 + $0x248] sm:$0xff]
    %v577 = vld [vmem:[#allocation7 + $0x250] sm:$0xff]
    %v578 = vld [vmem:[#allocation7 + $0x258] sm:$0xff]
    %v579 = vld [vmem:[#allocation7 + $0x260] sm:$0xff]
    %v580 = vld [vmem:[#allocation7 + $0x268] sm:$0xff]
    %v581 = vld [vmem:[#allocation7 + $0x270] sm:$0xff]
    %v582 = vld [vmem:[#allocation7 + $0x278] sm:$0xff]
    %v583 = vld [vmem:[#allocation7 + $0x280] sm:$0xff]
    %v584 = vld [vmem:[#allocation7 + $0x288] sm:$0xff]
    %v585 = vld [vmem:[#allocation7 + $0x290] sm:$0xff]
    %v586 = vld [vmem:[#allocation7 + $0x298] sm:$0xff]
    %v587 = vld [vmem:[#allocation7 + $0x2a0] sm:$0xff]
    %v588 = vld [vmem:[#allocation7 + $0x2a8] sm:$0xff]
    %v589 = vld [vmem:[#allocation7 + $0x2b0] sm:$0xff]
    %v590 = vld [vmem:[#allocation7 + $0x2b8] sm:$0xff]
    %v591 = vld [vmem:[#allocation7 + $0x2c0] sm:$0xff]
    %v592 = vld [vmem:[#allocation7 + $0x2c8] sm:$0xff]
    %v593 = vld [vmem:[#allocation7 + $0x2d0] sm:$0xff]
    %v594 = vld [vmem:[#allocation7 + $0x2d8] sm:$0xff]
    %v595 = vld [vmem:[#allocation7 + $0x2e0] sm:$0xff]
    %v596 = vld [vmem:[#allocation7 + $0x2e8] sm:$0xff]
    %v597 = vld [vmem:[#allocation7 + $0x2f0] sm:$0xff]
    %v598 = vld [vmem:[#allocation7 + $0x2f8] sm:$0xff]
    %v599 = vld [vmem:[#allocation7 + $0x300] sm:$0xff]
    %v600 = vld [vmem:[#allocation7 + $0x308] sm:$0xff]
    %v601 = vld [vmem:[#allocation7 + $0x310] sm:$0xff]
    %v602 = vld [vmem:[#allocation7 + $0x318] sm:$0xff]
    %v603 = vld [vmem:[#allocation7 + $0x320] sm:$0xff]
    %v604 = vld [vmem:[#allocation7 + $0x328] sm:$0xff]
    %v605 = vld [vmem:[#allocation7 + $0x330] sm:$0xff]
    %v606 = vld [vmem:[#allocation7 + $0x338] sm:$0xff]
    %v607 = vld [vmem:[#allocation7 + $0x340] sm:$0xff]
    %v608 = vld [vmem:[#allocation7 + $0x348] sm:$0xff]
    %v609 = vld [vmem:[#allocation7 + $0x350] sm:$0xff]
    %v610 = vld [vmem:[#allocation7 + $0x358] sm:$0xff]
    %v611 = vld [vmem:[#allocation7 + $0x360] sm:$0xff]
    %v612 = vld [vmem:[#allocation7 + $0x368] sm:$0xff]
    %v613 = vld [vmem:[#allocation7 + $0x370] sm:$0xff]
    %v614 = vld [vmem:[#allocation7 + $0x378] sm:$0xff]
    %v615 = vld [vmem:[#allocation7 + $0x380] sm:$0xff]
    %v616 = vld [vmem:[#allocation7 + $0x388] sm:$0xff]
    %v617 = vld [vmem:[#allocation7 + $0x390] sm:$0xff]
    %v618 = vld [vmem:[#allocation7 + $0x398] sm:$0xff]
    %v619 = vld [vmem:[#allocation7 + $0x3a0] sm:$0xff]
    %v620 = vld [vmem:[#allocation7 + $0x3a8] sm:$0xff]
    %v621 = vld [vmem:[#allocation7 + $0x3b0] sm:$0xff]
    %v622 = vld [vmem:[#allocation7 + $0x3b8] sm:$0xff]
    %v623 = vld [vmem:[#allocation7 + $0x3c0] sm:$0xff]
    %v624 = vld [vmem:[#allocation7 + $0x3c8] sm:$0xff]
    %v625 = vld [vmem:[#allocation7 + $0x3d0] sm:$0xff]
    %v626 = vld [vmem:[#allocation7 + $0x3d8] sm:$0xff]
    %v627 = vld [vmem:[#allocation7 + $0x3e0] sm:$0xff]
    %v628 = vld [vmem:[#allocation7 + $0x3e8] sm:$0xff]
    %v629 = vld [vmem:[#allocation7 + $0x3f0] sm:$0xff]
    %v630 = vld [vmem:[#allocation7 + $0x3f8] sm:$0xff]
    %v631 = vld [vmem:[#allocation7 + $0x400] sm:$0xff]
    %v632 = vld [vmem:[#allocation7 + $0x408] sm:$0xff]
    %v633 = vld [vmem:[#allocation7 + $0x410] sm:$0xff]
    %v634 = vld [vmem:[#allocation7 + $0x418] sm:$0xff]
    %v635 = vld [vmem:[#allocation7 + $0x420] sm:$0xff]
    %v636 = vld [vmem:[#allocation7 + $0x428] sm:$0xff]
    %v637 = vld [vmem:[#allocation7 + $0x430] sm:$0xff]
    %v638 = vld [vmem:[#allocation7 + $0x438] sm:$0xff]
    %v639 = vld [vmem:[#allocation7 + $0x440] sm:$0xff]
    %v640 = vld [vmem:[#allocation7 + $0x448] sm:$0xff]
    %v641 = vld [vmem:[#allocation7 + $0x450] sm:$0xff]
    %v642 = vld [vmem:[#allocation7 + $0x458] sm:$0xff]
    %v643 = vld [vmem:[#allocation7 + $0x460] sm:$0xff]
    %v644 = vld [vmem:[#allocation7 + $0x468] sm:$0xff]
    %v645 = vld [vmem:[#allocation7 + $0x470] sm:$0xff]
    %v646 = vld [vmem:[#allocation7 + $0x478] sm:$0xff]
    %v647 = vld [vmem:[#allocation7 + $0x480] sm:$0xff]
    %v648 = vld [vmem:[#allocation7 + $0x488] sm:$0xff]
    %v649 = vld [vmem:[#allocation7 + $0x490] sm:$0xff]
    %v650 = vsub.f32 1.0, %v356
    %v651 = vsub.f32 1.0, %v357
    %v652 = vsub.f32 1.0, %v358
    %v653 = vsub.f32 1.0, %v359
    %v654 = vsub.f32 1.0, %v360
    %v655 = vsub.f32 1.0, %v361
    %v656 = vsub.f32 1.0, %v362
    %v657 = vsub.f32 1.0, %v363
    %v658 = vsub.f32 1.0, %v364
    %v659 = vsub.f32 1.0, %v365
    %v660 = vsub.f32 1.0, %v366
    %v661 = vsub.f32 1.0, %v367
    %v662 = vsub.f32 1.0, %v368
    %v663 = vsub.f32 1.0, %v369
    %v664 = vsub.f32 1.0, %v370
    %v665 = vsub.f32 1.0, %v371
    %v666 = vsub.f32 1.0, %v372
    %v667 = vsub.f32 1.0, %v373
    %v668 = vsub.f32 1.0, %v374
    %v669 = vsub.f32 1.0, %v375
    %v670 = vsub.f32 1.0, %v376
    %v671 = vsub.f32 1.0, %v377
    %v672 = vsub.f32 1.0, %v378
    %v673 = vsub.f32 1.0, %v379
    %v674 = vsub.f32 1.0, %v380
    %v675 = vsub.f32 1.0, %v381
    %v676 = vsub.f32 1.0, %v382
    %v677 = vsub.f32 1.0, %v383
    %v678 = vsub.f32 1.0, %v384
    %v679 = vsub.f32 1.0, %v385
    %v680 = vsub.f32 1.0, %v386
    %v681 = vsub.f32 1.0, %v387
    %v682 = vsub.f32 1.0, %v388
    %v683 = vsub.f32 1.0, %v389
    %v684 = vsub.f32 1.0, %v390
    %v685 = vsub.f32 1.0, %v391
    %v686 = vsub.f32 1.0, %v392
    %v687 = vsub.f32 1.0, %v393
    %v688 = vsub.f32 1.0, %v394
    %v689 = vsub.f32 1.0, %v395
    %v690 = vsub.f32 1.0, %v396
    %v691 = vsub.f32 1.0, %v397
    %v692 = vsub.f32 1.0, %v398
    %v693 = vsub.f32 1.0, %v399
    %v694 = vsub.f32 1.0, %v400
    %v695 = vsub.f32 1.0, %v401
    %v696 = vsub.f32 1.0, %v402
    %v697 = vsub.f32 1.0, %v403
    %v698 = vsub.f32 1.0, %v404
    %v699 = vsub.f32 1.0, %v405
    %v700 = vsub.f32 1.0, %v406
    %v701 = vsub.f32 1.0, %v407
    %v702 = vsub.f32 1.0, %v408
    %v703 = vsub.f32 1.0, %v409
    %v704 = vsub.f32 1.0, %v410
    %v705 = vsub.f32 1.0, %v411
    %v706 = vsub.f32 1.0, %v412
    %v707 = vsub.f32 1.0, %v413
    %v708 = vsub.f32 1.0, %v414
    %v709 = vsub.f32 1.0, %v415
    %v710 = vsub.f32 1.0, %v416
    %v711 = vsub.f32 1.0, %v417
    %v712 = vsub.f32 1.0, %v418
    %v713 = vsub.f32 1.0, %v419
    %v714 = vsub.f32 1.0, %v420
    %v715 = vsub.f32 1.0, %v421
    %v716 = vsub.f32 1.0, %v422
    %v717 = vsub.f32 1.0, %v423
    %v718 = vsub.f32 1.0, %v424
    %v719 = vsub.f32 1.0, %v425
    %v720 = vsub.f32 1.0, %v426
    %v721 = vsub.f32 1.0, %v427
    %v722 = vsub.f32 1.0, %v428
    %v723 = vsub.f32 1.0, %v429
    %v724 = vsub.f32 1.0, %v430
    %v725 = vsub.f32 1.0, %v431
    %v726 = vsub.f32 1.0, %v432
    %v727 = vsub.f32 1.0, %v433
    %v728 = vsub.f32 1.0, %v434
    %v729 = vsub.f32 1.0, %v435
    %v730 = vsub.f32 1.0, %v436
    %v731 = vsub.f32 1.0, %v437
    %v732 = vsub.f32 1.0, %v438
    %v733 = vsub.f32 1.0, %v439
    %v734 = vsub.f32 1.0, %v440
    %v735 = vsub.f32 1.0, %v441
    %v736 = vsub.f32 1.0, %v442
    %v737 = vsub.f32 1.0, %v443
    %v738 = vsub.f32 1.0, %v444
    %v739 = vsub.f32 1.0, %v445
    %v740 = vsub.f32 1.0, %v446
    %v741 = vsub.f32 1.0, %v447
    %v742 = vsub.f32 1.0, %v448
    %v743 = vsub.f32 1.0, %v449
    %v744 = vsub.f32 1.0, %v450
    %v745 = vsub.f32 1.0, %v451
    %v746 = vsub.f32 1.0, %v452
    %v747 = vsub.f32 1.0, %v453
    %v748 = vsub.f32 1.0, %v454
    %v749 = vsub.f32 1.0, %v455
    %v750 = vsub.f32 1.0, %v456
    %v751 = vsub.f32 1.0, %v457
    %v752 = vsub.f32 1.0, %v458
    %v753 = vsub.f32 1.0, %v459
    %v754 = vsub.f32 1.0, %v460
    %v755 = vsub.f32 1.0, %v461
    %v756 = vsub.f32 1.0, %v462
    %v757 = vsub.f32 1.0, %v463
    %v758 = vsub.f32 1.0, %v464
    %v759 = vsub.f32 1.0, %v465
    %v760 = vsub.f32 1.0, %v466
    %v761 = vsub.f32 1.0, %v467
    %v762 = vsub.f32 1.0, %v468
    %v763 = vsub.f32 1.0, %v469
    %v764 = vsub.f32 1.0, %v470
    %v765 = vsub.f32 1.0, %v471
    %v766 = vsub.f32 1.0, %v472
    %v767 = vsub.f32 1.0, %v473
    %v768 = vsub.f32 1.0, %v474
    %v769 = vsub.f32 1.0, %v475
    %v770 = vsub.f32 1.0, %v476
    %v771 = vsub.f32 1.0, %v477
    %v772 = vsub.f32 1.0, %v478
    %v773 = vsub.f32 1.0, %v479
    %v774 = vsub.f32 1.0, %v480
    %v775 = vsub.f32 1.0, %v481
    %v776 = vsub.f32 1.0, %v482
    %v777 = vsub.f32 1.0, %v483
    %v778 = vsub.f32 1.0, %v484
    %v779 = vsub.f32 1.0, %v485
    %v780 = vsub.f32 1.0, %v486
    %v781 = vsub.f32 1.0, %v487
    %v782 = vsub.f32 1.0, %v488
    %v783 = vsub.f32 1.0, %v489
    %v784 = vsub.f32 1.0, %v490
    %v785 = vsub.f32 1.0, %v491
    %v786 = vsub.f32 1.0, %v492
    %v787 = vsub.f32 1.0, %v493
    %v788 = vsub.f32 1.0, %v494
    %v789 = vsub.f32 1.0, %v495
    %v790 = vsub.f32 1.0, %v496
    %v791 = vsub.f32 1.0, %v497
    %v792 = vsub.f32 1.0, %v498
    %v793 = vsub.f32 1.0, %v499
    %v794 = vsub.f32 1.0, %v500
    %v795 = vsub.f32 1.0, %v501
    %v796 = vsub.f32 1.0, %v502
    %v797 = vmul.f32 %v650, %v62
    %v798 = vmul.f32 %v651, %v63
    %v799 = vmul.f32 %v652, %v64
    %v800 = vmul.f32 %v653, %v65
    %v801 = vmul.f32 %v654, %v66
    %v802 = vmul.f32 %v655, %v67
    %v803 = vmul.f32 %v656, %v68
    %v804 = vmul.f32 %v657, %v69
    %v805 = vmul.f32 %v658, %v70
    %v806 = vmul.f32 %v659, %v71
    %v807 = vmul.f32 %v660, %v72
    %v808 = vmul.f32 %v661, %v73
    %v809 = vmul.f32 %v662, %v74
    %v810 = vmul.f32 %v663, %v75
    %v811 = vmul.f32 %v664, %v76
    %v812 = vmul.f32 %v665, %v77
    %v813 = vmul.f32 %v666, %v78
    %v814 = vmul.f32 %v667, %v79
    %v815 = vmul.f32 %v668, %v80
    %v816 = vmul.f32 %v669, %v81
    %v817 = vmul.f32 %v670, %v82
    %v818 = vmul.f32 %v671, %v83
    %v819 = vmul.f32 %v672, %v84
    %v820 = vmul.f32 %v673, %v85
    %v821 = vmul.f32 %v674, %v86
    %v822 = vmul.f32 %v675, %v87
    %v823 = vmul.f32 %v676, %v88
    %v824 = vmul.f32 %v677, %v89
    %v825 = vmul.f32 %v678, %v90
    %v826 = vmul.f32 %v679, %v91
    %v827 = vmul.f32 %v680, %v92
    %v828 = vmul.f32 %v681, %v93
    %v829 = vmul.f32 %v682, %v94
    %v830 = vmul.f32 %v683, %v95
    %v831 = vmul.f32 %v684, %v96
    %v832 = vmul.f32 %v685, %v97
    %v833 = vmul.f32 %v686, %v98
    %v834 = vmul.f32 %v687, %v99
    %v835 = vmul.f32 %v688, %v100
    %v836 = vmul.f32 %v689, %v101
    %v837 = vmul.f32 %v690, %v102
    %v838 = vmul.f32 %v691, %v103
    %v839 = vmul.f32 %v692, %v104
    %v840 = vmul.f32 %v693, %v105
    %v841 = vmul.f32 %v694, %v106
    %v842 = vmul.f32 %v695, %v107
    %v843 = vmul.f32 %v696, %v108
    %v844 = vmul.f32 %v697, %v109
    %v845 = vmul.f32 %v698, %v110
    %v846 = vmul.f32 %v699, %v111
    %v847 = vmul.f32 %v700, %v112
    %v848 = vmul.f32 %v701, %v113
    %v849 = vmul.f32 %v702, %v114
    %v850 = vmul.f32 %v703, %v115
    %v851 = vmul.f32 %v704, %v116
    %v852 = vmul.f32 %v705, %v117
    %v853 = vmul.f32 %v706, %v118
    %v854 = vmul.f32 %v707, %v119
    %v855 = vmul.f32 %v708, %v120
    %v856 = vmul.f32 %v709, %v121
    %v857 = vmul.f32 %v710, %v122
    %v858 = vmul.f32 %v711, %v123
    %v859 = vmul.f32 %v712, %v124
    %v860 = vmul.f32 %v713, %v125
    %v861 = vmul.f32 %v714, %v126
    %v862 = vmul.f32 %v715, %v127
    %v863 = vmul.f32 %v716, %v128
    %v864 = vmul.f32 %v717, %v129
    %v865 = vmul.f32 %v718, %v130
    %v866 = vmul.f32 %v719, %v131
    %v867 = vmul.f32 %v720, %v132
    %v868 = vmul.f32 %v721, %v133
    %v869 = vmul.f32 %v722, %v134
    %v870 = vmul.f32 %v723, %v135
    %v871 = vmul.f32 %v724, %v136
    %v872 = vmul.f32 %v725, %v137
    %v873 = vmul.f32 %v726, %v138
    %v874 = vmul.f32 %v727, %v139
    %v875 = vmul.f32 %v728, %v140
    %v876 = vmul.f32 %v729, %v141
    %v877 = vmul.f32 %v730, %v142
    %v878 = vmul.f32 %v731, %v143
    %v879 = vmul.f32 %v732, %v144
    %v880 = vmul.f32 %v733, %v145
    %v881 = vmul.f32 %v734, %v146
    %v882 = vmul.f32 %v735, %v147
    %v883 = vmul.f32 %v736, %v148
    %v884 = vmul.f32 %v737, %v149
    %v885 = vmul.f32 %v738, %v150
    %v886 = vmul.f32 %v739, %v151
    %v887 = vmul.f32 %v740, %v152
    %v888 = vmul.f32 %v741, %v153
    %v889 = vmul.f32 %v742, %v154
    %v890 = vmul.f32 %v743, %v155
    %v891 = vmul.f32 %v744, %v156
    %v892 = vmul.f32 %v745, %v157
    %v893 = vmul.f32 %v746, %v158
    %v894 = vmul.f32 %v747, %v159
    %v895 = vmul.f32 %v748, %v160
    %v896 = vmul.f32 %v749, %v161
    %v897 = vmul.f32 %v750, %v162
    %v898 = vmul.f32 %v751, %v163
    %v899 = vmul.f32 %v752, %v164
    %v900 = vmul.f32 %v753, %v165
    %v901 = vmul.f32 %v754, %v166
    %v902 = vmul.f32 %v755, %v167
    %v903 = vmul.f32 %v756, %v168
    %v904 = vmul.f32 %v757, %v169
    %v905 = vmul.f32 %v758, %v170
    %v906 = vmul.f32 %v759, %v171
    %v907 = vmul.f32 %v760, %v172
    %v908 = vmul.f32 %v761, %v173
    %v909 = vmul.f32 %v762, %v174
    %v910 = vmul.f32 %v763, %v175
    %v911 = vmul.f32 %v764, %v176
    %v912 = vmul.f32 %v765, %v177
    %v913 = vmul.f32 %v766, %v178
    %v914 = vmul.f32 %v767, %v179
    %v915 = vmul.f32 %v768, %v180
    %v916 = vmul.f32 %v769, %v181
    %v917 = vmul.f32 %v770, %v182
    %v918 = vmul.f32 %v771, %v183
    %v919 = vmul.f32 %v772, %v184
    %v920 = vmul.f32 %v773, %v185
    %v921 = vmul.f32 %v774, %v186
    %v922 = vmul.f32 %v775, %v187
    %v923 = vmul.f32 %v776, %v188
    %v924 = vmul.f32 %v777, %v189
    %v925 = vmul.f32 %v778, %v190
    %v926 = vmul.f32 %v779, %v191
    %v927 = vmul.f32 %v780, %v192
    %v928 = vmul.f32 %v781, %v193
    %v929 = vmul.f32 %v782, %v194
    %v930 = vmul.f32 %v783, %v195
    %v931 = vmul.f32 %v784, %v196
    %v932 = vmul.f32 %v785, %v197
    %v933 = vmul.f32 %v786, %v198
    %v934 = vmul.f32 %v787, %v199
    %v935 = vmul.f32 %v788, %v200
    %v936 = vmul.f32 %v789, %v201
    %v937 = vmul.f32 %v790, %v202
    %v938 = vmul.f32 %v791, %v203
    %v939 = vmul.f32 %v792, %v204
    %v940 = vmul.f32 %v793, %v205
    %v941 = vmul.f32 %v794, %v206
    %v942 = vmul.f32 %v795, %v207
    %v943 = vmul.f32 %v796, %v208
    %v944 = vmul.f32 %v650, %v209
    %v945 = vmul.f32 %v651, %v210
    %v946 = vmul.f32 %v652, %v211
    %v947 = vmul.f32 %v653, %v212
    %v948 = vmul.f32 %v654, %v213
    %v949 = vmul.f32 %v655, %v214
    %v950 = vmul.f32 %v656, %v215
    %v951 = vmul.f32 %v657, %v216
    %v952 = vmul.f32 %v658, %v217
    %v953 = vmul.f32 %v659, %v218
    %v954 = vmul.f32 %v660, %v219
    %v955 = vmul.f32 %v661, %v220
    %v956 = vmul.f32 %v662, %v221
    %v957 = vmul.f32 %v663, %v222
    %v958 = vmul.f32 %v664, %v223
    %v959 = vmul.f32 %v665, %v224
    %v960 = vmul.f32 %v666, %v225
    %v961 = vmul.f32 %v667, %v226
    %v962 = vmul.f32 %v668, %v227
    %v963 = vmul.f32 %v669, %v228
    %v964 = vmul.f32 %v670, %v229
    %v965 = vmul.f32 %v671, %v230
    %v966 = vmul.f32 %v672, %v231
    %v967 = vmul.f32 %v673, %v232
    %v968 = vmul.f32 %v674, %v233
    %v969 = vmul.f32 %v675, %v234
    %v970 = vmul.f32 %v676, %v235
    %v971 = vmul.f32 %v677, %v236
    %v972 = vmul.f32 %v678, %v237
    %v973 = vmul.f32 %v679, %v238
    %v974 = vmul.f32 %v680, %v239
    %v975 = vmul.f32 %v681, %v240
    %v976 = vmul.f32 %v682, %v241
    %v977 = vmul.f32 %v683, %v242
    %v978 = vmul.f32 %v684, %v243
    %v979 = vmul.f32 %v685, %v244
    %v980 = vmul.f32 %v686, %v245
    %v981 = vmul.f32 %v687, %v246
    %v982 = vmul.f32 %v688, %v247
    %v983 = vmul.f32 %v689, %v248
    %v984 = vmul.f32 %v690, %v249
    %v985 = vmul.f32 %v691, %v250
    %v986 = vmul.f32 %v692, %v251
    %v987 = vmul.f32 %v693, %v252
    %v988 = vmul.f32 %v694, %v253
    %v989 = vmul.f32 %v695, %v254
    %v990 = vmul.f32 %v696, %v255
    %v991 = vmul.f32 %v697, %v256
    %v992 = vmul.f32 %v698, %v257
    %v993 = vmul.f32 %v699, %v258
    %v994 = vmul.f32 %v700, %v259
    %v995 = vmul.f32 %v701, %v260
    %v996 = vmul.f32 %v702, %v261
    %v997 = vmul.f32 %v703, %v262
    %v998 = vmul.f32 %v704, %v263
    %v999 = vmul.f32 %v705, %v264
    %v1000 = vmul.f32 %v706, %v265
    %v1001 = vmul.f32 %v707, %v266
    %v1002 = vmul.f32 %v708, %v267
    %v1003 = vmul.f32 %v709, %v268
    %v1004 = vmul.f32 %v710, %v269
    %v1005 = vmul.f32 %v711, %v270
    %v1006 = vmul.f32 %v712, %v271
    %v1007 = vmul.f32 %v713, %v272
    %v1008 = vmul.f32 %v714, %v273
    %v1009 = vmul.f32 %v715, %v274
    %v1010 = vmul.f32 %v716, %v275
    %v1011 = vmul.f32 %v717, %v276
    %v1012 = vmul.f32 %v718, %v277
    %v1013 = vmul.f32 %v719, %v278
    %v1014 = vmul.f32 %v720, %v279
    %v1015 = vmul.f32 %v721, %v280
    %v1016 = vmul.f32 %v722, %v281
    %v1017 = vmul.f32 %v723, %v282
    %v1018 = vmul.f32 %v724, %v283
    %v1019 = vmul.f32 %v725, %v284
    %v1020 = vmul.f32 %v726, %v285
    %v1021 = vmul.f32 %v727, %v286
    %v1022 = vmul.f32 %v728, %v287
    %v1023 = vmul.f32 %v729, %v288
    %v1024 = vmul.f32 %v730, %v289
    %v1025 = vmul.f32 %v731, %v290
    %v1026 = vmul.f32 %v732, %v291
    %v1027 = vmul.f32 %v733, %v292
    %v1028 = vmul.f32 %v734, %v293
    %v1029 = vmul.f32 %v735, %v294
    %v1030 = vmul.f32 %v736, %v295
    %v1031 = vmul.f32 %v737, %v296
    %v1032 = vmul.f32 %v738, %v297
    %v1033 = vmul.f32 %v739, %v298
    %v1034 = vmul.f32 %v740, %v299
    %v1035 = vmul.f32 %v741, %v300
    %v1036 = vmul.f32 %v742, %v301
    %v1037 = vmul.f32 %v743, %v302
    %v1038 = vmul.f32 %v744, %v303
    %v1039 = vmul.f32 %v745, %v304
    %v1040 = vmul.f32 %v746, %v305
    %v1041 = vmul.f32 %v747, %v306
    %v1042 = vmul.f32 %v748, %v307
    %v1043 = vmul.f32 %v749, %v308
    %v1044 = vmul.f32 %v750, %v309
    %v1045 = vmul.f32 %v751, %v310
    %v1046 = vmul.f32 %v752, %v311
    %v1047 = vmul.f32 %v753, %v312
    %v1048 = vmul.f32 %v754, %v313
    %v1049 = vmul.f32 %v755, %v314
    %v1050 = vmul.f32 %v756, %v315
    %v1051 = vmul.f32 %v757, %v316
    %v1052 = vmul.f32 %v758, %v317
    %v1053 = vmul.f32 %v759, %v318
    %v1054 = vmul.f32 %v760, %v319
    %v1055 = vmul.f32 %v761, %v320
    %v1056 = vmul.f32 %v762, %v321
    %v1057 = vmul.f32 %v763, %v322
    %v1058 = vmul.f32 %v764, %v323
    %v1059 = vmul.f32 %v765, %v324
    %v1060 = vmul.f32 %v766, %v325
    %v1061 = vmul.f32 %v767, %v326
    %v1062 = vmul.f32 %v768, %v327
    %v1063 = vmul.f32 %v769, %v328
    %v1064 = vmul.f32 %v770, %v329
    %v1065 = vmul.f32 %v771, %v330
    %v1066 = vmul.f32 %v772, %v331
    %v1067 = vmul.f32 %v773, %v332
    %v1068 = vmul.f32 %v774, %v333
    %v1069 = vmul.f32 %v775, %v334
    %v1070 = vmul.f32 %v776, %v335
    %v1071 = vmul.f32 %v777, %v336
    %v1072 = vmul.f32 %v778, %v337
    %v1073 = vmul.f32 %v779, %v338
    %v1074 = vmul.f32 %v780, %v339
    %v1075 = vmul.f32 %v781, %v340
    %v1076 = vmul.f32 %v782, %v341
    %v1077 = vmul.f32 %v783, %v342
    %v1078 = vmul.f32 %v784, %v343
    %v1079 = vmul.f32 %v785, %v344
    %v1080 = vmul.f32 %v786, %v345
    %v1081 = vmul.f32 %v787, %v346
    %v1082 = vmul.f32 %v788, %v347
    %v1083 = vmul.f32 %v789, %v348
    %v1084 = vmul.f32 %v790, %v349
    %v1085 = vmul.f32 %v791, %v350
    %v1086 = vmul.f32 %v792, %v351
    %v1087 = vmul.f32 %v793, %v352
    %v1088 = vmul.f32 %v794, %v353
    %v1089 = vmul.f32 %v795, %v354
    %v1090 = vmul.f32 %v796, %v355
    %v1091 = vmul.f32 %v356, %v503
    %v1092 = vmul.f32 %v357, %v504
    %v1093 = vmul.f32 %v358, %v505
    %v1094 = vmul.f32 %v359, %v506
    %v1095 = vmul.f32 %v360, %v507
    %v1096 = vmul.f32 %v361, %v508
    %v1097 = vmul.f32 %v362, %v509
    %v1098 = vmul.f32 %v363, %v510
    %v1099 = vmul.f32 %v364, %v511
    %v1100 = vmul.f32 %v365, %v512
    %v1101 = vmul.f32 %v366, %v513
    %v1102 = vmul.f32 %v367, %v514
    %v1103 = vmul.f32 %v368, %v515
    %v1104 = vmul.f32 %v369, %v516
    %v1105 = vmul.f32 %v370, %v517
    %v1106 = vmul.f32 %v371, %v518
    %v1107 = vmul.f32 %v372, %v519
    %v1108 = vmul.f32 %v373, %v520
    %v1109 = vmul.f32 %v374, %v521
    %v1110 = vmul.f32 %v375, %v522
    %v1111 = vmul.f32 %v376, %v523
    %v1112 = vmul.f32 %v377, %v524
    %v1113 = vmul.f32 %v378, %v525
    %v1114 = vmul.f32 %v379, %v526
    %v1115 = vmul.f32 %v380, %v527
    %v1116 = vmul.f32 %v381, %v528
    %v1117 = vmul.f32 %v382, %v529
    %v1118 = vmul.f32 %v383, %v530
    %v1119 = vmul.f32 %v384, %v531
    %v1120 = vmul.f32 %v385, %v532
    %v1121 = vmul.f32 %v386, %v533
    %v1122 = vmul.f32 %v387, %v534
    %v1123 = vmul.f32 %v388, %v535
    %v1124 = vmul.f32 %v389, %v536
    %v1125 = vmul.f32 %v390, %v537
    %v1126 = vmul.f32 %v391, %v538
    %v1127 = vmul.f32 %v392, %v539
    %v1128 = vmul.f32 %v393, %v540
    %v1129 = vmul.f32 %v394, %v541
    %v1130 = vmul.f32 %v395, %v542
    %v1131 = vmul.f32 %v396, %v543
    %v1132 = vmul.f32 %v397, %v544
    %v1133 = vmul.f32 %v398, %v545
    %v1134 = vmul.f32 %v399, %v546
    %v1135 = vmul.f32 %v400, %v547
    %v1136 = vmul.f32 %v401, %v548
    %v1137 = vmul.f32 %v402, %v549
    %v1138 = vmul.f32 %v403, %v550
    %v1139 = vmul.f32 %v404, %v551
    %v1140 = vmul.f32 %v405, %v552
    %v1141 = vmul.f32 %v406, %v553
    %v1142 = vmul.f32 %v407, %v554
    %v1143 = vmul.f32 %v408, %v555
    %v1144 = vmul.f32 %v409, %v556
    %v1145 = vmul.f32 %v410, %v557
    %v1146 = vmul.f32 %v411, %v558
    %v1147 = vmul.f32 %v412, %v559
    %v1148 = vmul.f32 %v413, %v560
    %v1149 = vmul.f32 %v414, %v561
    %v1150 = vmul.f32 %v415, %v562
    %v1151 = vmul.f32 %v416, %v563
    %v1152 = vmul.f32 %v417, %v564
    %v1153 = vmul.f32 %v418, %v565
    %v1154 = vmul.f32 %v419, %v566
    %v1155 = vmul.f32 %v420, %v567
    %v1156 = vmul.f32 %v421, %v568
    %v1157 = vmul.f32 %v422, %v569
    %v1158 = vmul.f32 %v423, %v570
    %v1159 = vmul.f32 %v424, %v571
    %v1160 = vmul.f32 %v425, %v572
    %v1161 = vmul.f32 %v426, %v573
    %v1162 = vmul.f32 %v427, %v574
    %v1163 = vmul.f32 %v428, %v575
    %v1164 = vmul.f32 %v429, %v576
    %v1165 = vmul.f32 %v430, %v577
    %v1166 = vmul.f32 %v431, %v578
    %v1167 = vmul.f32 %v432, %v579
    %v1168 = vmul.f32 %v433, %v580
    %v1169 = vmul.f32 %v434, %v581
    %v1170 = vmul.f32 %v435, %v582
    %v1171 = vmul.f32 %v436, %v583
    %v1172 = vmul.f32 %v437, %v584
    %v1173 = vmul.f32 %v438, %v585
    %v1174 = vmul.f32 %v439, %v586
    %v1175 = vmul.f32 %v440, %v587
    %v1176 = vmul.f32 %v441, %v588
    %v1177 = vmul.f32 %v442, %v589
    %v1178 = vmul.f32 %v443, %v590
    %v1179 = vmul.f32 %v444, %v591
    %v1180 = vmul.f32 %v445, %v592
    %v1181 = vmul.f32 %v446, %v593
    %v1182 = vmul.f32 %v447, %v594
    %v1183 = vmul.f32 %v448, %v595
    %v1184 = vmul.f32 %v449, %v596
    %v1185 = vmul.f32 %v450, %v597
    %v1186 = vmul.f32 %v451, %v598
    %v1187 = vmul.f32 %v452, %v599
    %v1188 = vmul.f32 %v453, %v600
    %v1189 = vmul.f32 %v454, %v601
    %v1190 = vmul.f32 %v455, %v602
    %v1191 = vmul.f32 %v456, %v603
    %v1192 = vmul.f32 %v457, %v604
    %v1193 = vmul.f32 %v458, %v605
    %v1194 = vmul.f32 %v459, %v606
    %v1195 = vmul.f32 %v460, %v607
    %v1196 = vmul.f32 %v461, %v608
    %v1197 = vmul.f32 %v462, %v609
    %v1198 = vmul.f32 %v463, %v610
    %v1199 = vmul.f32 %v464, %v611
    %v1200 = vmul.f32 %v465, %v612
    %v1201 = vmul.f32 %v466, %v613
    %v1202 = vmul.f32 %v467, %v614
    %v1203 = vmul.f32 %v468, %v615
    %v1204 = vmul.f32 %v469, %v616
    %v1205 = vmul.f32 %v470, %v617
    %v1206 = vmul.f32 %v471, %v618
    %v1207 = vmul.f32 %v472, %v619
    %v1208 = vmul.f32 %v473, %v620
    %v1209 = vmul.f32 %v474, %v621
    %v1210 = vmul.f32 %v475, %v622
    %v1211 = vmul.f32 %v476, %v623
    %v1212 = vmul.f32 %v477, %v624
    %v1213 = vmul.f32 %v478, %v625
    %v1214 = vmul.f32 %v479, %v626
    %v1215 = vmul.f32 %v480, %v627
    %v1216 = vmul.f32 %v481, %v628
    %v1217 = vmul.f32 %v482, %v629
    %v1218 = vmul.f32 %v483, %v630
    %v1219 = vmul.f32 %v484, %v631
    %v1220 = vmul.f32 %v485, %v632
    %v1221 = vmul.f32 %v486, %v633
    %v1222 = vmul.f32 %v487, %v634
    %v1223 = vmul.f32 %v488, %v635
    %v1224 = vmul.f32 %v489, %v636
    %v1225 = vmul.f32 %v490, %v637
    %v1226 = vmul.f32 %v491, %v638
    %v1227 = vmul.f32 %v492, %v639
    %v1228 = vmul.f32 %v493, %v640
    %v1229 = vmul.f32 %v494, %v641
    %v1230 = vmul.f32 %v495, %v642
    %v1231 = vmul.f32 %v496, %v643
    %v1232 = vmul.f32 %v497, %v644
    %v1233 = vmul.f32 %v498, %v645
    %v1234 = vmul.f32 %v499, %v646
    %v1235 = vmul.f32 %v500, %v647
    %v1236 = vmul.f32 %v501, %v648
    %v1237 = vmul.f32 %v502, %v649
    %v1238 = vadd.f32 %v797, %v1091
    %v1239 = vadd.f32 %v798, %v1092
    %v1240 = vadd.f32 %v799, %v1093
    %v1241 = vadd.f32 %v800, %v1094
    %v1242 = vadd.f32 %v801, %v1095
    %v1243 = vadd.f32 %v802, %v1096
    %v1244 = vadd.f32 %v803, %v1097
    %v1245 = vadd.f32 %v804, %v1098
    %v1246 = vadd.f32 %v805, %v1099
    %v1247 = vadd.f32 %v806, %v1100
    %v1248 = vadd.f32 %v807, %v1101
    %v1249 = vadd.f32 %v808, %v1102
    %v1250 = vadd.f32 %v809, %v1103
    %v1251 = vadd.f32 %v810, %v1104
    %v1252 = vadd.f32 %v811, %v1105
    %v1253 = vadd.f32 %v812, %v1106
    %v1254 = vadd.f32 %v813, %v1107
    %v1255 = vadd.f32 %v814, %v1108
    %v1256 = vadd.f32 %v815, %v1109
    %v1257 = vadd.f32 %v816, %v1110
    %v1258 = vadd.f32 %v817, %v1111
    %v1259 = vadd.f32 %v818, %v1112
    %v1260 = vadd.f32 %v819, %v1113
    %v1261 = vadd.f32 %v820, %v1114
    %v1262 = vadd.f32 %v821, %v1115
    %v1263 = vadd.f32 %v822, %v1116
    %v1264 = vadd.f32 %v823, %v1117
    %v1265 = vadd.f32 %v824, %v1118
    %v1266 = vadd.f32 %v825, %v1119
    %v1267 = vadd.f32 %v826, %v1120
    %v1268 = vadd.f32 %v827, %v1121
    %v1269 = vadd.f32 %v828, %v1122
    %v1270 = vadd.f32 %v829, %v1123
    %v1271 = vadd.f32 %v830, %v1124
    %v1272 = vadd.f32 %v831, %v1125
    %v1273 = vadd.f32 %v832, %v1126
    %v1274 = vadd.f32 %v833, %v1127
    %v1275 = vadd.f32 %v834, %v1128
    %v1276 = vadd.f32 %v835, %v1129
    %v1277 = vadd.f32 %v836, %v1130
    %v1278 = vadd.f32 %v837, %v1131
    %v1279 = vadd.f32 %v838, %v1132
    %v1280 = vadd.f32 %v839, %v1133
    %v1281 = vadd.f32 %v840, %v1134
    %v1282 = vadd.f32 %v841, %v1135
    %v1283 = vadd.f32 %v842, %v1136
    %v1284 = vadd.f32 %v843, %v1137
    %v1285 = vadd.f32 %v844, %v1138
    %v1286 = vadd.f32 %v845, %v1139
    %v1287 = vadd.f32 %v846, %v1140
    %v1288 = vadd.f32 %v847, %v1141
    %v1289 = vadd.f32 %v848, %v1142
    %v1290 = vadd.f32 %v849, %v1143
    %v1291 = vadd.f32 %v850, %v1144
    %v1292 = vadd.f32 %v851, %v1145
    %v1293 = vadd.f32 %v852, %v1146
    %v1294 = vadd.f32 %v853, %v1147
    %v1295 = vadd.f32 %v854, %v1148
    %v1296 = vadd.f32 %v855, %v1149
    %v1297 = vadd.f32 %v856, %v1150
    %v1298 = vadd.f32 %v857, %v1151
    %v1299 = vadd.f32 %v858, %v1152
    %v1300 = vadd.f32 %v859, %v1153
    %v1301 = vadd.f32 %v860, %v1154
    %v1302 = vadd.f32 %v861, %v1155
    %v1303 = vadd.f32 %v862, %v1156
    %v1304 = vadd.f32 %v863, %v1157
    %v1305 = vadd.f32 %v864, %v1158
    %v1306 = vadd.f32 %v865, %v1159
    %v1307 = vadd.f32 %v866, %v1160
    %v1308 = vadd.f32 %v867, %v1161
    %v1309 = vadd.f32 %v868, %v1162
    %v1310 = vadd.f32 %v869, %v1163
    %v1311 = vadd.f32 %v870, %v1164
    %v1312 = vadd.f32 %v871, %v1165
    %v1313 = vadd.f32 %v872, %v1166
    %v1314 = vadd.f32 %v873, %v1167
    %v1315 = vadd.f32 %v874, %v1168
    %v1316 = vadd.f32 %v875, %v1169
    %v1317 = vadd.f32 %v876, %v1170
    %v1318 = vadd.f32 %v877, %v1171
    %v1319 = vadd.f32 %v878, %v1172
    %v1320 = vadd.f32 %v879, %v1173
    %v1321 = vadd.f32 %v880, %v1174
    %v1322 = vadd.f32 %v881, %v1175
    %v1323 = vadd.f32 %v882, %v1176
    %v1324 = vadd.f32 %v883, %v1177
    %v1325 = vadd.f32 %v884, %v1178
    %v1326 = vadd.f32 %v885, %v1179
    %v1327 = vadd.f32 %v886, %v1180
    %v1328 = vadd.f32 %v887, %v1181
    %v1329 = vadd.f32 %v888, %v1182
    %v1330 = vadd.f32 %v889, %v1183
    %v1331 = vadd.f32 %v890, %v1184
    %v1332 = vadd.f32 %v891, %v1185
    %v1333 = vadd.f32 %v892, %v1186
    %v1334 = vadd.f32 %v893, %v1187
    %v1335 = vadd.f32 %v894, %v1188
    %v1336 = vadd.f32 %v895, %v1189
    %v1337 = vadd.f32 %v896, %v1190
    %v1338 = vadd.f32 %v897, %v1191
    %v1339 = vadd.f32 %v898, %v1192
    %v1340 = vadd.f32 %v899, %v1193
    %v1341 = vadd.f32 %v900, %v1194
    %v1342 = vadd.f32 %v901, %v1195
    %v1343 = vadd.f32 %v902, %v1196
    %v1344 = vadd.f32 %v903, %v1197
    %v1345 = vadd.f32 %v904, %v1198
    %v1346 = vadd.f32 %v905, %v1199
    %v1347 = vadd.f32 %v906, %v1200
    %v1348 = vadd.f32 %v907, %v1201
    %v1349 = vadd.f32 %v908, %v1202
    %v1350 = vadd.f32 %v909, %v1203
    %v1351 = vadd.f32 %v910, %v1204
    %v1352 = vadd.f32 %v911, %v1205
    %v1353 = vadd.f32 %v912, %v1206
    %v1354 = vadd.f32 %v913, %v1207
    %v1355 = vadd.f32 %v914, %v1208
    %v1356 = vadd.f32 %v915, %v1209
    %v1357 = vadd.f32 %v916, %v1210
    %v1358 = vadd.f32 %v917, %v1211
    %v1359 = vadd.f32 %v918, %v1212
    %v1360 = vadd.f32 %v919, %v1213
    %v1361 = vadd.f32 %v920, %v1214
    %v1362 = vadd.f32 %v921, %v1215
    %v1363 = vadd.f32 %v922, %v1216
    %v1364 = vadd.f32 %v923, %v1217
    %v1365 = vadd.f32 %v924, %v1218
    %v1366 = vadd.f32 %v925, %v1219
    %v1367 = vadd.f32 %v926, %v1220
    %v1368 = vadd.f32 %v927, %v1221
    %v1369 = vadd.f32 %v928, %v1222
    %v1370 = vadd.f32 %v929, %v1223
    %v1371 = vadd.f32 %v930, %v1224
    %v1372 = vadd.f32 %v931, %v1225
    %v1373 = vadd.f32 %v932, %v1226
    %v1374 = vadd.f32 %v933, %v1227
    %v1375 = vadd.f32 %v934, %v1228
    %v1376 = vadd.f32 %v935, %v1229
    %v1377 = vadd.f32 %v936, %v1230
    %v1378 = vadd.f32 %v937, %v1231
    %v1379 = vadd.f32 %v938, %v1232
    %v1380 = vadd.f32 %v939, %v1233
    %v1381 = vadd.f32 %v940, %v1234
    %v1382 = vadd.f32 %v941, %v1235
    %v1383 = vadd.f32 %v942, %v1236
    %v1384 = vadd.f32 %v943, %v1237
    %v1385 = vadd.f32 %v944, %v1091
    %v1386 = vadd.f32 %v945, %v1092
    %v1387 = vadd.f32 %v946, %v1093
    %v1388 = vadd.f32 %v947, %v1094
    %v1389 = vadd.f32 %v948, %v1095
    %v1390 = vadd.f32 %v949, %v1096
    %v1391 = vadd.f32 %v950, %v1097
    %v1392 = vadd.f32 %v951, %v1098
    %v1393 = vadd.f32 %v952, %v1099
    %v1394 = vadd.f32 %v953, %v1100
    %v1395 = vadd.f32 %v954, %v1101
    %v1396 = vadd.f32 %v955, %v1102
    %v1397 = vadd.f32 %v956, %v1103
    %v1398 = vadd.f32 %v957, %v1104
    %v1399 = vadd.f32 %v958, %v1105
    %v1400 = vadd.f32 %v959, %v1106
    %v1401 = vadd.f32 %v960, %v1107
    %v1402 = vadd.f32 %v961, %v1108
    %v1403 = vadd.f32 %v962, %v1109
    %v1404 = vadd.f32 %v963, %v1110
    %v1405 = vadd.f32 %v964, %v1111
    %v1406 = vadd.f32 %v965, %v1112
    %v1407 = vadd.f32 %v966, %v1113
    %v1408 = vadd.f32 %v967, %v1114
    %v1409 = vadd.f32 %v968, %v1115
    %v1410 = vadd.f32 %v969, %v1116
    %v1411 = vadd.f32 %v970, %v1117
    %v1412 = vadd.f32 %v971, %v1118
    %v1413 = vadd.f32 %v972, %v1119
    %v1414 = vadd.f32 %v973, %v1120
    %v1415 = vadd.f32 %v974, %v1121
    %v1416 = vadd.f32 %v975, %v1122
    %v1417 = vadd.f32 %v976, %v1123
    %v1418 = vadd.f32 %v977, %v1124
    %v1419 = vadd.f32 %v978, %v1125
    %v1420 = vadd.f32 %v979, %v1126
    %v1421 = vadd.f32 %v980, %v1127
    %v1422 = vadd.f32 %v981, %v1128
    %v1423 = vadd.f32 %v982, %v1129
    %v1424 = vadd.f32 %v983, %v1130
    %v1425 = vadd.f32 %v984, %v1131
    %v1426 = vadd.f32 %v985, %v1132
    %v1427 = vadd.f32 %v986, %v1133
    %v1428 = vadd.f32 %v987, %v1134
    %v1429 = vadd.f32 %v988, %v1135
    %v1430 = vadd.f32 %v989, %v1136
    %v1431 = vadd.f32 %v990, %v1137
    %v1432 = vadd.f32 %v991, %v1138
    %v1433 = vadd.f32 %v992, %v1139
    %v1434 = vadd.f32 %v993, %v1140
    %v1435 = vadd.f32 %v994, %v1141
    %v1436 = vadd.f32 %v995, %v1142
    %v1437 = vadd.f32 %v996, %v1143
    %v1438 = vadd.f32 %v997, %v1144
    %v1439 = vadd.f32 %v998, %v1145
    %v1440 = vadd.f32 %v999, %v1146
    %v1441 = vadd.f32 %v1000, %v1147
    %v1442 = vadd.f32 %v1001, %v1148
    %v1443 = vadd.f32 %v1002, %v1149
    %v1444 = vadd.f32 %v1003, %v1150
    %v1445 = vadd.f32 %v1004, %v1151
    %v1446 = vadd.f32 %v1005, %v1152
    %v1447 = vadd.f32 %v1006, %v1153
    %v1448 = vadd.f32 %v1007, %v1154
    %v1449 = vadd.f32 %v1008, %v1155
    %v1450 = vadd.f32 %v1009, %v1156
    %v1451 = vadd.f32 %v1010, %v1157
    %v1452 = vadd.f32 %v1011, %v1158
    %v1453 = vadd.f32 %v1012, %v1159
    %v1454 = vadd.f32 %v1013, %v1160
    %v1455 = vadd.f32 %v1014, %v1161
    %v1456 = vadd.f32 %v1015, %v1162
    %v1457 = vadd.f32 %v1016, %v1163
    %v1458 = vadd.f32 %v1017, %v1164
    %v1459 = vadd.f32 %v1018, %v1165
    %v1460 = vadd.f32 %v1019, %v1166
    %v1461 = vadd.f32 %v1020, %v1167
    %v1462 = vadd.f32 %v1021, %v1168
    %v1463 = vadd.f32 %v1022, %v1169
    %v1464 = vadd.f32 %v1023, %v1170
    %v1465 = vadd.f32 %v1024, %v1171
    %v1466 = vadd.f32 %v1025, %v1172
    %v1467 = vadd.f32 %v1026, %v1173
    %v1468 = vadd.f32 %v1027, %v1174
    %v1469 = vadd.f32 %v1028, %v1175
    %v1470 = vadd.f32 %v1029, %v1176
    %v1471 = vadd.f32 %v1030, %v1177
    %v1472 = vadd.f32 %v1031, %v1178
    %v1473 = vadd.f32 %v1032, %v1179
    %v1474 = vadd.f32 %v1033, %v1180
    %v1475 = vadd.f32 %v1034, %v1181
    %v1476 = vadd.f32 %v1035, %v1182
    %v1477 = vadd.f32 %v1036, %v1183
    %v1478 = vadd.f32 %v1037, %v1184
    %v1479 = vadd.f32 %v1038, %v1185
    %v1480 = vadd.f32 %v1039, %v1186
    %v1481 = vadd.f32 %v1040, %v1187
    %v1482 = vadd.f32 %v1041, %v1188
    %v1483 = vadd.f32 %v1042, %v1189
    %v1484 = vadd.f32 %v1043, %v1190
    %v1485 = vadd.f32 %v1044, %v1191
    %v1486 = vadd.f32 %v1045, %v1192
    %v1487 = vadd.f32 %v1046, %v1193
    %v1488 = vadd.f32 %v1047, %v1194
    %v1489 = vadd.f32 %v1048, %v1195
    %v1490 = vadd.f32 %v1049, %v1196
    %v1491 = vadd.f32 %v1050, %v1197
    %v1492 = vadd.f32 %v1051, %v1198
    %v1493 = vadd.f32 %v1052, %v1199
    %v1494 = vadd.f32 %v1053, %v1200
    %v1495 = vadd.f32 %v1054, %v1201
    %v1496 = vadd.f32 %v1055, %v1202
    %v1497 = vadd.f32 %v1056, %v1203
    %v1498 = vadd.f32 %v1057, %v1204
    %v1499 = vadd.f32 %v1058, %v1205
    %v1500 = vadd.f32 %v1059, %v1206
    %v1501 = vadd.f32 %v1060, %v1207
    %v1502 = vadd.f32 %v1061, %v1208
    %v1503 = vadd.f32 %v1062, %v1209
    %v1504 = vadd.f32 %v1063, %v1210
    %v1505 = vadd.f32 %v1064, %v1211
    %v1506 = vadd.f32 %v1065, %v1212
    %v1507 = vadd.f32 %v1066, %v1213
    %v1508 = vadd.f32 %v1067, %v1214
    %v1509 = vadd.f32 %v1068, %v1215
    %v1510 = vadd.f32 %v1069, %v1216
    %v1511 = vadd.f32 %v1070, %v1217
    %v1512 = vadd.f32 %v1071, %v1218
    %v1513 = vadd.f32 %v1072, %v1219
    %v1514 = vadd.f32 %v1073, %v1220
    %v1515 = vadd.f32 %v1074, %v1221
    %v1516 = vadd.f32 %v1075, %v1222
    %v1517 = vadd.f32 %v1076, %v1223
    %v1518 = vadd.f32 %v1077, %v1224
    %v1519 = vadd.f32 %v1078, %v1225
    %v1520 = vadd.f32 %v1079, %v1226
    %v1521 = vadd.f32 %v1080, %v1227
    %v1522 = vadd.f32 %v1081, %v1228
    %v1523 = vadd.f32 %v1082, %v1229
    %v1524 = vadd.f32 %v1083, %v1230
    %v1525 = vadd.f32 %v1084, %v1231
    %v1526 = vadd.f32 %v1085, %v1232
    %v1527 = vadd.f32 %v1086, %v1233
    %v1528 = vadd.f32 %v1087, %v1234
    %v1529 = vadd.f32 %v1088, %v1235
    %v1530 = vadd.f32 %v1089, %v1236
    %v1531 = vadd.f32 %v1090, %v1237
    %v1532 = vmax.f32 %v1238, 0.0
    %v1533 = vmax.f32 %v1239, 0.0
    %v1534 = vmax.f32 %v1240, 0.0
    %v1535 = vmax.f32 %v1241, 0.0
    %v1536 = vmax.f32 %v1242, 0.0
    %v1537 = vmax.f32 %v1243, 0.0
    %v1538 = vmax.f32 %v1244, 0.0
    %v1539 = vmax.f32 %v1245, 0.0
    %v1540 = vmax.f32 %v1246, 0.0
    %v1541 = vmax.f32 %v1247, 0.0
    %v1542 = vmax.f32 %v1248, 0.0
    %v1543 = vmax.f32 %v1249, 0.0
    %v1544 = vmax.f32 %v1250, 0.0
    %v1545 = vmax.f32 %v1251, 0.0
    %v1546 = vmax.f32 %v1252, 0.0
    %v1547 = vmax.f32 %v1253, 0.0
    %v1548 = vmax.f32 %v1254, 0.0
    %v1549 = vmax.f32 %v1255, 0.0
    %v1550 = vmax.f32 %v1256, 0.0
    %v1551 = vmax.f32 %v1257, 0.0
    %v1552 = vmax.f32 %v1258, 0.0
    %v1553 = vmax.f32 %v1259, 0.0
    %v1554 = vmax.f32 %v1260, 0.0
    %v1555 = vmax.f32 %v1261, 0.0
    %v1556 = vmax.f32 %v1262, 0.0
    %v1557 = vmax.f32 %v1263, 0.0
    %v1558 = vmax.f32 %v1264, 0.0
    %v1559 = vmax.f32 %v1265, 0.0
    %v1560 = vmax.f32 %v1266, 0.0
    %v1561 = vmax.f32 %v1267, 0.0
    %v1562 = vmax.f32 %v1268, 0.0
    %v1563 = vmax.f32 %v1269, 0.0
    %v1564 = vmax.f32 %v1270, 0.0
    %v1565 = vmax.f32 %v1271, 0.0
    %v1566 = vmax.f32 %v1272, 0.0
    %v1567 = vmax.f32 %v1273, 0.0
    %v1568 = vmax.f32 %v1274, 0.0
    %v1569 = vmax.f32 %v1275, 0.0
    %v1570 = vmax.f32 %v1276, 0.0
    %v1571 = vmax.f32 %v1277, 0.0
    %v1572 = vmax.f32 %v1278, 0.0
    %v1573 = vmax.f32 %v1279, 0.0
    %v1574 = vmax.f32 %v1280, 0.0
    %v1575 = vmax.f32 %v1281, 0.0
    %v1576 = vmax.f32 %v1282, 0.0
    %v1577 = vmax.f32 %v1283, 0.0
    %v1578 = vmax.f32 %v1284, 0.0
    %v1579 = vmax.f32 %v1285, 0.0
    %v1580 = vmax.f32 %v1286, 0.0
    %v1581 = vmax.f32 %v1287, 0.0
    %v1582 = vmax.f32 %v1288, 0.0
    %v1583 = vmax.f32 %v1289, 0.0
    %v1584 = vmax.f32 %v1290, 0.0
    %v1585 = vmax.f32 %v1291, 0.0
    %v1586 = vmax.f32 %v1292, 0.0
    %v1587 = vmax.f32 %v1293, 0.0
    %v1588 = vmax.f32 %v1294, 0.0
    %v1589 = vmax.f32 %v1295, 0.0
    %v1590 = vmax.f32 %v1296, 0.0
    %v1591 = vmax.f32 %v1297, 0.0
    %v1592 = vmax.f32 %v1298, 0.0
    %v1593 = vmax.f32 %v1299, 0.0
    %v1594 = vmax.f32 %v1300, 0.0
    %v1595 = vmax.f32 %v1301, 0.0
    %v1596 = vmax.f32 %v1302, 0.0
    %v1597 = vmax.f32 %v1303, 0.0
    %v1598 = vmax.f32 %v1304, 0.0
    %v1599 = vmax.f32 %v1305, 0.0
    %v1600 = vmax.f32 %v1306, 0.0
    %v1601 = vmax.f32 %v1307, 0.0
    %v1602 = vmax.f32 %v1308, 0.0
    %v1603 = vmax.f32 %v1309, 0.0
    %v1604 = vmax.f32 %v1310, 0.0
    %v1605 = vmax.f32 %v1311, 0.0
    %v1606 = vmax.f32 %v1312, 0.0
    %v1607 = vmax.f32 %v1313, 0.0
    %v1608 = vmax.f32 %v1314, 0.0
    %v1609 = vmax.f32 %v1315, 0.0
    %v1610 = vmax.f32 %v1316, 0.0
    %v1611 = vmax.f32 %v1317, 0.0
    %v1612 = vmax.f32 %v1318, 0.0
    %v1613 = vmax.f32 %v1319, 0.0
    %v1614 = vmax.f32 %v1320, 0.0
    %v1615 = vmax.f32 %v1321, 0.0
    %v1616 = vmax.f32 %v1322, 0.0
    %v1617 = vmax.f32 %v1323, 0.0
    %v1618 = vmax.f32 %v1324, 0.0
    %v1619 = vmax.f32 %v1325, 0.0
    %v1620 = vmax.f32 %v1326, 0.0
    %v1621 = vmax.f32 %v1327, 0.0
    %v1622 = vmax.f32 %v1328, 0.0
    %v1623 = vmax.f32 %v1329, 0.0
    %v1624 = vmax.f32 %v1330, 0.0
    %v1625 = vmax.f32 %v1331, 0.0
    %v1626 = vmax.f32 %v1332, 0.0
    %v1627 = vmax.f32 %v1333, 0.0
    %v1628 = vmax.f32 %v1334, 0.0
    %v1629 = vmax.f32 %v1335, 0.0
    %v1630 = vmax.f32 %v1336, 0.0
    %v1631 = vmax.f32 %v1337, 0.0
    %v1632 = vmax.f32 %v1338, 0.0
    %v1633 = vmax.f32 %v1339, 0.0
    %v1634 = vmax.f32 %v1340, 0.0
    %v1635 = vmax.f32 %v1341, 0.0
    %v1636 = vmax.f32 %v1342, 0.0
    %v1637 = vmax.f32 %v1343, 0.0
    %v1638 = vmax.f32 %v1344, 0.0
    %v1639 = vmax.f32 %v1345, 0.0
    %v1640 = vmax.f32 %v1346, 0.0
    %v1641 = vmax.f32 %v1347, 0.0
    %v1642 = vmax.f32 %v1348, 0.0
    %v1643 = vmax.f32 %v1349, 0.0
    %v1644 = vmax.f32 %v1350, 0.0
    %v1645 = vmax.f32 %v1351, 0.0
    %v1646 = vmax.f32 %v1352, 0.0
    %v1647 = vmax.f32 %v1353, 0.0
    %v1648 = vmax.f32 %v1354, 0.0
    %v1649 = vmax.f32 %v1355, 0.0
    %v1650 = vmax.f32 %v1356, 0.0
    %v1651 = vmax.f32 %v1357, 0.0
    %v1652 = vmax.f32 %v1358, 0.0
    %v1653 = vmax.f32 %v1359, 0.0
    %v1654 = vmax.f32 %v1360, 0.0
    %v1655 = vmax.f32 %v1361, 0.0
    %v1656 = vmax.f32 %v1362, 0.0
    %v1657 = vmax.f32 %v1363, 0.0
    %v1658 = vmax.f32 %v1364, 0.0
    %v1659 = vmax.f32 %v1365, 0.0
    %v1660 = vmax.f32 %v1366, 0.0
    %v1661 = vmax.f32 %v1367, 0.0
    %v1662 = vmax.f32 %v1368, 0.0
    %v1663 = vmax.f32 %v1369, 0.0
    %v1664 = vmax.f32 %v1370, 0.0
    %v1665 = vmax.f32 %v1371, 0.0
    %v1666 = vmax.f32 %v1372, 0.0
    %v1667 = vmax.f32 %v1373, 0.0
    %v1668 = vmax.f32 %v1374, 0.0
    %v1669 = vmax.f32 %v1375, 0.0
    %v1670 = vmax.f32 %v1376, 0.0
    %v1671 = vmax.f32 %v1377, 0.0
    %v1672 = vmax.f32 %v1378, 0.0
    %v1673 = vmax.f32 %v1379, 0.0
    %v1674 = vmax.f32 %v1380, 0.0
    %v1675 = vmax.f32 %v1381, 0.0
    %v1676 = vmax.f32 %v1382, 0.0
    %v1677 = vmax.f32 %v1383, 0.0
    %v1678 = vmax.f32 %v1384, 0.0
    %v1679 = vmax.f32 %v1385, 0.0
    %v1680 = vmax.f32 %v1386, 0.0
    %v1681 = vmax.f32 %v1387, 0.0
    %v1682 = vmax.f32 %v1388, 0.0
    %v1683 = vmax.f32 %v1389, 0.0
    %v1684 = vmax.f32 %v1390, 0.0
    %v1685 = vmax.f32 %v1391, 0.0
    %v1686 = vmax.f32 %v1392, 0.0
    %v1687 = vmax.f32 %v1393, 0.0
    %v1688 = vmax.f32 %v1394, 0.0
    %v1689 = vmax.f32 %v1395, 0.0
    %v1690 = vmax.f32 %v1396, 0.0
    %v1691 = vmax.f32 %v1397, 0.0
    %v1692 = vmax.f32 %v1398, 0.0
    %v1693 = vmax.f32 %v1399, 0.0
    %v1694 = vmax.f32 %v1400, 0.0
    %v1695 = vmax.f32 %v1401, 0.0
    %v1696 = vmax.f32 %v1402, 0.0
    %v1697 = vmax.f32 %v1403, 0.0
    %v1698 = vmax.f32 %v1404, 0.0
    %v1699 = vmax.f32 %v1405, 0.0
    %v1700 = vmax.f32 %v1406, 0.0
    %v1701 = vmax.f32 %v1407, 0.0
    %v1702 = vmax.f32 %v1408, 0.0
    %v1703 = vmax.f32 %v1409, 0.0
    %v1704 = vmax.f32 %v1410, 0.0
    %v1705 = vmax.f32 %v1411, 0.0
    %v1706 = vmax.f32 %v1412, 0.0
    %v1707 = vmax.f32 %v1413, 0.0
    %v1708 = vmax.f32 %v1414, 0.0
    %v1709 = vmax.f32 %v1415, 0.0
    %v1710 = vmax.f32 %v1416, 0.0
    %v1711 = vmax.f32 %v1417, 0.0
    %v1712 = vmax.f32 %v1418, 0.0
    %v1713 = vmax.f32 %v1419, 0.0
    %v1714 = vmax.f32 %v1420, 0.0
    %v1715 = vmax.f32 %v1421, 0.0
    %v1716 = vmax.f32 %v1422, 0.0
    %v1717 = vmax.f32 %v1423, 0.0
    %v1718 = vmax.f32 %v1424, 0.0
    %v1719 = vmax.f32 %v1425, 0.0
    %v1720 = vmax.f32 %v1426, 0.0
    %v1721 = vmax.f32 %v1427, 0.0
    %v1722 = vmax.f32 %v1428, 0.0
    %v1723 = vmax.f32 %v1429, 0.0
    %v1724 = vmax.f32 %v1430, 0.0
    %v1725 = vmax.f32 %v1431, 0.0
    %v1726 = vmax.f32 %v1432, 0.0
    %v1727 = vmax.f32 %v1433, 0.0
    %v1728 = vmax.f32 %v1434, 0.0
    %v1729 = vmax.f32 %v1435, 0.0
    %v1730 = vmax.f32 %v1436, 0.0
    %v1731 = vmax.f32 %v1437, 0.0
    %v1732 = vmax.f32 %v1438, 0.0
    %v1733 = vmax.f32 %v1439, 0.0
    %v1734 = vmax.f32 %v1440, 0.0
    %v1735 = vmax.f32 %v1441, 0.0
    %v1736 = vmax.f32 %v1442, 0.0
    %v1737 = vmax.f32 %v1443, 0.0
    %v1738 = vmax.f32 %v1444, 0.0
    %v1739 = vmax.f32 %v1445, 0.0
    %v1740 = vmax.f32 %v1446, 0.0
    %v1741 = vmax.f32 %v1447, 0.0
    %v1742 = vmax.f32 %v1448, 0.0
    %v1743 = vmax.f32 %v1449, 0.0
    %v1744 = vmax.f32 %v1450, 0.0
    %v1745 = vmax.f32 %v1451, 0.0
    %v1746 = vmax.f32 %v1452, 0.0
    %v1747 = vmax.f32 %v1453, 0.0
    %v1748 = vmax.f32 %v1454, 0.0
    %v1749 = vmax.f32 %v1455, 0.0
    %v1750 = vmax.f32 %v1456, 0.0
    %v1751 = vmax.f32 %v1457, 0.0
    %v1752 = vmax.f32 %v1458, 0.0
    %v1753 = vmax.f32 %v1459, 0.0
    %v1754 = vmax.f32 %v1460, 0.0
    %v1755 = vmax.f32 %v1461, 0.0
    %v1756 = vmax.f32 %v1462, 0.0
    %v1757 = vmax.f32 %v1463, 0.0
    %v1758 = vmax.f32 %v1464, 0.0
    %v1759 = vmax.f32 %v1465, 0.0
    %v1760 = vmax.f32 %v1466, 0.0
    %v1761 = vmax.f32 %v1467, 0.0
    %v1762 = vmax.f32 %v1468, 0.0
    %v1763 = vmax.f32 %v1469, 0.0
    %v1764 = vmax.f32 %v1470, 0.0
    %v1765 = vmax.f32 %v1471, 0.0
    %v1766 = vmax.f32 %v1472, 0.0
    %v1767 = vmax.f32 %v1473, 0.0
    %v1768 = vmax.f32 %v1474, 0.0
    %v1769 = vmax.f32 %v1475, 0.0
    %v1770 = vmax.f32 %v1476, 0.0
    %v1771 = vmax.f32 %v1477, 0.0
    %v1772 = vmax.f32 %v1478, 0.0
    %v1773 = vmax.f32 %v1479, 0.0
    %v1774 = vmax.f32 %v1480, 0.0
    %v1775 = vmax.f32 %v1481, 0.0
    %v1776 = vmax.f32 %v1482, 0.0
    %v1777 = vmax.f32 %v1483, 0.0
    %v1778 = vmax.f32 %v1484, 0.0
    %v1779 = vmax.f32 %v1485, 0.0
    %v1780 = vmax.f32 %v1486, 0.0
    %v1781 = vmax.f32 %v1487, 0.0
    %v1782 = vmax.f32 %v1488, 0.0
    %v1783 = vmax.f32 %v1489, 0.0
    %v1784 = vmax.f32 %v1490, 0.0
    %v1785 = vmax.f32 %v1491, 0.0
    %v1786 = vmax.f32 %v1492, 0.0
    %v1787 = vmax.f32 %v1493, 0.0
    %v1788 = vmax.f32 %v1494, 0.0
    %v1789 = vmax.f32 %v1495, 0.0
    %v1790 = vmax.f32 %v1496, 0.0
    %v1791 = vmax.f32 %v1497, 0.0
    %v1792 = vmax.f32 %v1498, 0.0
    %v1793 = vmax.f32 %v1499, 0.0
    %v1794 = vmax.f32 %v1500, 0.0
    %v1795 = vmax.f32 %v1501, 0.0
    %v1796 = vmax.f32 %v1502, 0.0
    %v1797 = vmax.f32 %v1503, 0.0
    %v1798 = vmax.f32 %v1504, 0.0
    %v1799 = vmax.f32 %v1505, 0.0
    %v1800 = vmax.f32 %v1506, 0.0
    %v1801 = vmax.f32 %v1507, 0.0
    %v1802 = vmax.f32 %v1508, 0.0
    %v1803 = vmax.f32 %v1509, 0.0
    %v1804 = vmax.f32 %v1510, 0.0
    %v1805 = vmax.f32 %v1511, 0.0
    %v1806 = vmax.f32 %v1512, 0.0
    %v1807 = vmax.f32 %v1513, 0.0
    %v1808 = vmax.f32 %v1514, 0.0
    %v1809 = vmax.f32 %v1515, 0.0
    %v1810 = vmax.f32 %v1516, 0.0
    %v1811 = vmax.f32 %v1517, 0.0
    %v1812 = vmax.f32 %v1518, 0.0
    %v1813 = vmax.f32 %v1519, 0.0
    %v1814 = vmax.f32 %v1520, 0.0
    %v1815 = vmax.f32 %v1521, 0.0
    %v1816 = vmax.f32 %v1522, 0.0
    %v1817 = vmax.f32 %v1523, 0.0
    %v1818 = vmax.f32 %v1524, 0.0
    %v1819 = vmax.f32 %v1525, 0.0
    %v1820 = vmax.f32 %v1526, 0.0
    %v1821 = vmax.f32 %v1527, 0.0
    %v1822 = vmax.f32 %v1528, 0.0
    %v1823 = vmax.f32 %v1529, 0.0
    %v1824 = vmax.f32 %v1530, 0.0
    %v1825 = vmax.f32 %v1531, 0.0
    %v1826 = vmin.f32 %v1532, 1.0
    %v1827 = vmin.f32 %v1533, 1.0
    %v1828 = vmin.f32 %v1534, 1.0
    %v1829 = vmin.f32 %v1535, 1.0
    %v1830 = vmin.f32 %v1536, 1.0
    %v1831 = vmin.f32 %v1537, 1.0
    %v1832 = vmin.f32 %v1538, 1.0
    %v1833 = vmin.f32 %v1539, 1.0
    %v1834 = vmin.f32 %v1540, 1.0
    %v1835 = vmin.f32 %v1541, 1.0
    %v1836 = vmin.f32 %v1542, 1.0
    %v1837 = vmin.f32 %v1543, 1.0
    %v1838 = vmin.f32 %v1544, 1.0
    %v1839 = vmin.f32 %v1545, 1.0
    %v1840 = vmin.f32 %v1546, 1.0
    %v1841 = vmin.f32 %v1547, 1.0
    %v1842 = vmin.f32 %v1548, 1.0
    %v1843 = vmin.f32 %v1549, 1.0
    %v1844 = vmin.f32 %v1550, 1.0
    %v1845 = vmin.f32 %v1551, 1.0
    %v1846 = vmin.f32 %v1552, 1.0
    %v1847 = vmin.f32 %v1553, 1.0
    %v1848 = vmin.f32 %v1554, 1.0
    %v1849 = vmin.f32 %v1555, 1.0
    %v1850 = vmin.f32 %v1556, 1.0
    %v1851 = vmin.f32 %v1557, 1.0
    %v1852 = vmin.f32 %v1558, 1.0
    %v1853 = vmin.f32 %v1559, 1.0
    %v1854 = vmin.f32 %v1560, 1.0
    %v1855 = vmin.f32 %v1561, 1.0
    %v1856 = vmin.f32 %v1562, 1.0
    %v1857 = vmin.f32 %v1563, 1.0
    %v1858 = vmin.f32 %v1564, 1.0
    %v1859 = vmin.f32 %v1565, 1.0
    %v1860 = vmin.f32 %v1566, 1.0
    %v1861 = vmin.f32 %v1567, 1.0
    %v1862 = vmin.f32 %v1568, 1.0
    %v1863 = vmin.f32 %v1569, 1.0
    %v1864 = vmin.f32 %v1570, 1.0
    %v1865 = vmin.f32 %v1571, 1.0
    %v1866 = vmin.f32 %v1572, 1.0
    %v1867 = vmin.f32 %v1573, 1.0
    %v1868 = vmin.f32 %v1574, 1.0
    %v1869 = vmin.f32 %v1575, 1.0
    %v1870 = vmin.f32 %v1576, 1.0
    %v1871 = vmin.f32 %v1577, 1.0
    %v1872 = vmin.f32 %v1578, 1.0
    %v1873 = vmin.f32 %v1579, 1.0
    %v1874 = vmin.f32 %v1580, 1.0
    %v1875 = vmin.f32 %v1581, 1.0
    %v1876 = vmin.f32 %v1582, 1.0
    %v1877 = vmin.f32 %v1583, 1.0
    %v1878 = vmin.f32 %v1584, 1.0
    %v1879 = vmin.f32 %v1585, 1.0
    %v1880 = vmin.f32 %v1586, 1.0
    %v1881 = vmin.f32 %v1587, 1.0
    %v1882 = vmin.f32 %v1588, 1.0
    %v1883 = vmin.f32 %v1589, 1.0
    %v1884 = vmin.f32 %v1590, 1.0
    %v1885 = vmin.f32 %v1591, 1.0
    %v1886 = vmin.f32 %v1592, 1.0
    %v1887 = vmin.f32 %v1593, 1.0
    %v1888 = vmin.f32 %v1594, 1.0
    %v1889 = vmin.f32 %v1595, 1.0
    %v1890 = vmin.f32 %v1596, 1.0
    %v1891 = vmin.f32 %v1597, 1.0
    %v1892 = vmin.f32 %v1598, 1.0
    %v1893 = vmin.f32 %v1599, 1.0
    %v1894 = vmin.f32 %v1600, 1.0
    %v1895 = vmin.f32 %v1601, 1.0
    %v1896 = vmin.f32 %v1602, 1.0
    %v1897 = vmin.f32 %v1603, 1.0
    %v1898 = vmin.f32 %v1604, 1.0
    %v1899 = vmin.f32 %v1605, 1.0
    %v1900 = vmin.f32 %v1606, 1.0
    %v1901 = vmin.f32 %v1607, 1.0
    %v1902 = vmin.f32 %v1608, 1.0
    %v1903 = vmin.f32 %v1609, 1.0
    %v1904 = vmin.f32 %v1610, 1.0
    %v1905 = vmin.f32 %v1611, 1.0
    %v1906 = vmin.f32 %v1612, 1.0
    %v1907 = vmin.f32 %v1613, 1.0
    %v1908 = vmin.f32 %v1614, 1.0
    %v1909 = vmin.f32 %v1615, 1.0
    %v1910 = vmin.f32 %v1616, 1.0
    %v1911 = vmin.f32 %v1617, 1.0
    %v1912 = vmin.f32 %v1618, 1.0
    %v1913 = vmin.f32 %v1619, 1.0
    %v1914 = vmin.f32 %v1620, 1.0
    %v1915 = vmin.f32 %v1621, 1.0
    %v1916 = vmin.f32 %v1622, 1.0
    %v1917 = vmin.f32 %v1623, 1.0
    %v1918 = vmin.f32 %v1624, 1.0
    %v1919 = vmin.f32 %v1625, 1.0
    %v1920 = vmin.f32 %v1626, 1.0
    %v1921 = vmin.f32 %v1627, 1.0
    %v1922 = vmin.f32 %v1628, 1.0
    %v1923 = vmin.f32 %v1629, 1.0
    %v1924 = vmin.f32 %v1630, 1.0
    %v1925 = vmin.f32 %v1631, 1.0
    %v1926 = vmin.f32 %v1632, 1.0
    %v1927 = vmin.f32 %v1633, 1.0
    %v1928 = vmin.f32 %v1634, 1.0
    %v1929 = vmin.f32 %v1635, 1.0
    %v1930 = vmin.f32 %v1636, 1.0
    %v1931 = vmin.f32 %v1637, 1.0
    %v1932 = vmin.f32 %v1638, 1.0
    %v1933 = vmin.f32 %v1639, 1.0
    %v1934 = vmin.f32 %v1640, 1.0
    %v1935 = vmin.f32 %v1641, 1.0
    %v1936 = vmin.f32 %v1642, 1.0
    %v1937 = vmin.f32 %v1643, 1.0
    %v1938 = vmin.f32 %v1644, 1.0
    %v1939 = vmin.f32 %v1645, 1.0
    %v1940 = vmin.f32 %v1646, 1.0
    %v1941 = vmin.f32 %v1647, 1.0
    %v1942 = vmin.f32 %v1648, 1.0
    %v1943 = vmin.f32 %v1649, 1.0
    %v1944 = vmin.f32 %v1650, 1.0
    %v1945 = vmin.f32 %v1651, 1.0
    %v1946 = vmin.f32 %v1652, 1.0
    %v1947 = vmin.f32 %v1653, 1.0
    %v1948 = vmin.f32 %v1654, 1.0
    %v1949 = vmin.f32 %v1655, 1.0
    %v1950 = vmin.f32 %v1656, 1.0
    %v1951 = vmin.f32 %v1657, 1.0
    %v1952 = vmin.f32 %v1658, 1.0
    %v1953 = vmin.f32 %v1659, 1.0
    %v1954 = vmin.f32 %v1660, 1.0
    %v1955 = vmin.f32 %v1661, 1.0
    %v1956 = vmin.f32 %v1662, 1.0
    %v1957 = vmin.f32 %v1663, 1.0
    %v1958 = vmin.f32 %v1664, 1.0
    %v1959 = vmin.f32 %v1665, 1.0
    %v1960 = vmin.f32 %v1666, 1.0
    %v1961 = vmin.f32 %v1667, 1.0
    %v1962 = vmin.f32 %v1668, 1.0
    %v1963 = vmin.f32 %v1669, 1.0
    %v1964 = vmin.f32 %v1670, 1.0
    %v1965 = vmin.f32 %v1671, 1.0
    %v1966 = vmin.f32 %v1672, 1.0
    %v1967 = vmin.f32 %v1673, 1.0
    %v1968 = vmin.f32 %v1674, 1.0
    %v1969 = vmin.f32 %v1675, 1.0
    %v1970 = vmin.f32 %v1676, 1.0
    %v1971 = vmin.f32 %v1677, 1.0
    %v1972 = vmin.f32 %v1678, 1.0
    %v1973 = vmin.f32 %v1679, 1.0
    %v1974 = vmin.f32 %v1680, 1.0
    %v1975 = vmin.f32 %v1681, 1.0
    %v1976 = vmin.f32 %v1682, 1.0
    %v1977 = vmin.f32 %v1683, 1.0
    %v1978 = vmin.f32 %v1684, 1.0
    %v1979 = vmin.f32 %v1685, 1.0
    %v1980 = vmin.f32 %v1686, 1.0
    %v1981 = vmin.f32 %v1687, 1.0
    %v1982 = vmin.f32 %v1688, 1.0
    %v1983 = vmin.f32 %v1689, 1.0
    %v1984 = vmin.f32 %v1690, 1.0
    %v1985 = vmin.f32 %v1691, 1.0
    %v1986 = vmin.f32 %v1692, 1.0
    %v1987 = vmin.f32 %v1693, 1.0
    %v1988 = vmin.f32 %v1694, 1.0
    %v1989 = vmin.f32 %v1695, 1.0
    %v1990 = vmin.f32 %v1696, 1.0
    %v1991 = vmin.f32 %v1697, 1.0
    %v1992 = vmin.f32 %v1698, 1.0
    %v1993 = vmin.f32 %v1699, 1.0
    %v1994 = vmin.f32 %v1700, 1.0
    %v1995 = vmin.f32 %v1701, 1.0
    %v1996 = vmin.f32 %v1702, 1.0
    %v1997 = vmin.f32 %v1703, 1.0
    %v1998 = vmin.f32 %v1704, 1.0
    %v1999 = vmin.f32 %v1705, 1.0
    %v2000 = vmin.f32 %v1706, 1.0
    %v2001 = vmin.f32 %v1707, 1.0
    %v2002 = vmin.f32 %v1708, 1.0
    %v2003 = vmin.f32 %v1709, 1.0
    %v2004 = vmin.f32 %v1710, 1.0
    %v2005 = vmin.f32 %v1711, 1.0
    %v2006 = vmin.f32 %v1712, 1.0
    %v2007 = vmin.f32 %v1713, 1.0
    %v2008 = vmin.f32 %v1714, 1.0
    %v2009 = vmin.f32 %v1715, 1.0
    %v2010 = vmin.f32 %v1716, 1.0
    %v2011 = vmin.f32 %v1717, 1.0
    %v2012 = vmin.f32 %v1718, 1.0
    %v2013 = vmin.f32 %v1719, 1.0
    %v2014 = vmin.f32 %v1720, 1.0
    %v2015 = vmin.f32 %v1721, 1.0
    %v2016 = vmin.f32 %v1722, 1.0
    %v2017 = vmin.f32 %v1723, 1.0
    %v2018 = vmin.f32 %v1724, 1.0
    %v2019 = vmin.f32 %v1725, 1.0
    %v2020 = vmin.f32 %v1726, 1.0
    %v2021 = vmin.f32 %v1727, 1.0
    %v2022 = vmin.f32 %v1728, 1.0
    %v2023 = vmin.f32 %v1729, 1.0
    %v2024 = vmin.f32 %v1730, 1.0
    %v2025 = vmin.f32 %v1731, 1.0
    %v2026 = vmin.f32 %v1732, 1.0
    %v2027 = vmin.f32 %v1733, 1.0
    %v2028 = vmin.f32 %v1734, 1.0
    %v2029 = vmin.f32 %v1735, 1.0
    %v2030 = vmin.f32 %v1736, 1.0
    %v2031 = vmin.f32 %v1737, 1.0
    %v2032 = vmin.f32 %v1738, 1.0
    %v2033 = vmin.f32 %v1739, 1.0
    %v2034 = vmin.f32 %v1740, 1.0
    %v2035 = vmin.f32 %v1741, 1.0
    %v2036 = vmin.f32 %v1742, 1.0
    %v2037 = vmin.f32 %v1743, 1.0
    %v2038 = vmin.f32 %v1744, 1.0
    %v2039 = vmin.f32 %v1745, 1.0
    %v2040 = vmin.f32 %v1746, 1.0
    %v2041 = vmin.f32 %v1747, 1.0
    %v2042 = vmin.f32 %v1748, 1.0
    %v2043 = vmin.f32 %v1749, 1.0
    %v2044 = vmin.f32 %v1750, 1.0
    %v2045 = vmin.f32 %v1751, 1.0
    %v2046 = vmin.f32 %v1752, 1.0
    %v2047 = vmin.f32 %v1753, 1.0
    %v2048 = vmin.f32 %v1754, 1.0
    %v2049 = vmin.f32 %v1755, 1.0
    %v2050 = vmin.f32 %v1756, 1.0
    %v2051 = vmin.f32 %v1757, 1.0
    %v2052 = vmin.f32 %v1758, 1.0
    %v2053 = vmin.f32 %v1759, 1.0
    %v2054 = vmin.f32 %v1760, 1.0
    %v2055 = vmin.f32 %v1761, 1.0
    %v2056 = vmin.f32 %v1762, 1.0
    %v2057 = vmin.f32 %v1763, 1.0
    %v2058 = vmin.f32 %v1764, 1.0
    %v2059 = vmin.f32 %v1765, 1.0
    %v2060 = vmin.f32 %v1766, 1.0
    %v2061 = vmin.f32 %v1767, 1.0
    %v2062 = vmin.f32 %v1768, 1.0
    %v2063 = vmin.f32 %v1769, 1.0
    %v2064 = vmin.f32 %v1770, 1.0
    %v2065 = vmin.f32 %v1771, 1.0
    %v2066 = vmin.f32 %v1772, 1.0
    %v2067 = vmin.f32 %v1773, 1.0
    %v2068 = vmin.f32 %v1774, 1.0
    %v2069 = vmin.f32 %v1775, 1.0
    %v2070 = vmin.f32 %v1776, 1.0
    %v2071 = vmin.f32 %v1777, 1.0
    %v2072 = vmin.f32 %v1778, 1.0
    %v2073 = vmin.f32 %v1779, 1.0
    %v2074 = vmin.f32 %v1780, 1.0
    %v2075 = vmin.f32 %v1781, 1.0
    %v2076 = vmin.f32 %v1782, 1.0
    %v2077 = vmin.f32 %v1783, 1.0
    %v2078 = vmin.f32 %v1784, 1.0
    %v2079 = vmin.f32 %v1785, 1.0
    %v2080 = vmin.f32 %v1786, 1.0
    %v2081 = vmin.f32 %v1787, 1.0
    %v2082 = vmin.f32 %v1788, 1.0
    %v2083 = vmin.f32 %v1789, 1.0
    %v2084 = vmin.f32 %v1790, 1.0
    %v2085 = vmin.f32 %v1791, 1.0
    %v2086 = vmin.f32 %v1792, 1.0
    %v2087 = vmin.f32 %v1793, 1.0
    %v2088 = vmin.f32 %v1794, 1.0
    %v2089 = vmin.f32 %v1795, 1.0
    %v2090 = vmin.f32 %v1796, 1.0
    %v2091 = vmin.f32 %v1797, 1.0
    %v2092 = vmin.f32 %v1798, 1.0
    %v2093 = vmin.f32 %v1799, 1.0
    %v2094 = vmin.f32 %v1800, 1.0
    %v2095 = vmin.f32 %v1801, 1.0
    %v2096 = vmin.f32 %v1802, 1.0
    %v2097 = vmin.f32 %v1803, 1.0
    %v2098 = vmin.f32 %v1804, 1.0
    %v2099 = vmin.f32 %v1805, 1.0
    %v2100 = vmin.f32 %v1806, 1.0
    %v2101 = vmin.f32 %v1807, 1.0
    %v2102 = vmin.f32 %v1808, 1.0
    %v2103 = vmin.f32 %v1809, 1.0
    %v2104 = vmin.f32 %v1810, 1.0
    %v2105 = vmin.f32 %v1811, 1.0
    %v2106 = vmin.f32 %v1812, 1.0
    %v2107 = vmin.f32 %v1813, 1.0
    %v2108 = vmin.f32 %v1814, 1.0
    %v2109 = vmin.f32 %v1815, 1.0
    %v2110 = vmin.f32 %v1816, 1.0
    %v2111 = vmin.f32 %v1817, 1.0
    %v2112 = vmin.f32 %v1818, 1.0
    %v2113 = vmin.f32 %v1819, 1.0
    %v2114 = vmin.f32 %v1820, 1.0
    %v2115 = vmin.f32 %v1821, 1.0
    %v2116 = vmin.f32 %v1822, 1.0
    %v2117 = vmin.f32 %v1823, 1.0
    %v2118 = vmin.f32 %v1824, 1.0
    %v2119 = vmin.f32 %v1825, 1.0
    %2120 = vst [vmem:[#allocation8] sm:$0xff] %v1826
    %2121 = vst [vmem:[#allocation8 + $0x8] sm:$0xff] %v1827
    %2122 = vst [vmem:[#allocation8 + $0x10] sm:$0xff] %v1828
    %2123 = vst [vmem:[#allocation8 + $0x18] sm:$0xff] %v1829
    %2124 = vst [vmem:[#allocation8 + $0x20] sm:$0xff] %v1830
    %2125 = vst [vmem:[#allocation8 + $0x28] sm:$0xff] %v1831
    %2126 = vst [vmem:[#allocation8 + $0x30] sm:$0xff] %v1832
    %2127 = vst [vmem:[#allocation8 + $0x38] sm:$0xff] %v1833
    %2128 = vst [vmem:[#allocation8 + $0x40] sm:$0xff] %v1834
    %2129 = vst [vmem:[#allocation8 + $0x48] sm:$0xff] %v1835
    %2130 = vst [vmem:[#allocation8 + $0x50] sm:$0xff] %v1836
    %2131 = vst [vmem:[#allocation8 + $0x58] sm:$0xff] %v1837
    %2132 = vst [vmem:[#allocation8 + $0x60] sm:$0xff] %v1838
    %2133 = vst [vmem:[#allocation8 + $0x68] sm:$0xff] %v1839
    %2134 = vst [vmem:[#allocation8 + $0x70] sm:$0xff] %v1840
    %2135 = vst [vmem:[#allocation8 + $0x78] sm:$0xff] %v1841
    %2136 = vst [vmem:[#allocation8 + $0x80] sm:$0xff] %v1842
    %2137 = vst [vmem:[#allocation8 + $0x88] sm:$0xff] %v1843
    %2138 = vst [vmem:[#allocation8 + $0x90] sm:$0xff] %v1844
    %2139 = vst [vmem:[#allocation8 + $0x98] sm:$0xff] %v1845
    %2140 = vst [vmem:[#allocation8 + $0xa0] sm:$0xff] %v1846
    %2141 = vst [vmem:[#allocation8 + $0xa8] sm:$0xff] %v1847
    %2142 = vst [vmem:[#allocation8 + $0xb0] sm:$0xff] %v1848
    %2143 = vst [vmem:[#allocation8 + $0xb8] sm:$0xff] %v1849
    %2144 = vst [vmem:[#allocation8 + $0xc0] sm:$0xff] %v1850
    %2145 = vst [vmem:[#allocation8 + $0xc8] sm:$0xff] %v1851
    %2146 = vst [vmem:[#allocation8 + $0xd0] sm:$0xff] %v1852
    %2147 = vst [vmem:[#allocation8 + $0xd8] sm:$0xff] %v1853
    %2148 = vst [vmem:[#allocation8 + $0xe0] sm:$0xff] %v1854
    %2149 = vst [vmem:[#allocation8 + $0xe8] sm:$0xff] %v1855
    %2150 = vst [vmem:[#allocation8 + $0xf0] sm:$0xff] %v1856
    %2151 = vst [vmem:[#allocation8 + $0xf8] sm:$0xff] %v1857
    %2152 = vst [vmem:[#allocation8 + $0x100] sm:$0xff] %v1858
    %2153 = vst [vmem:[#allocation8 + $0x108] sm:$0xff] %v1859
    %2154 = vst [vmem:[#allocation8 + $0x110] sm:$0xff] %v1860
    %2155 = vst [vmem:[#allocation8 + $0x118] sm:$0xff] %v1861
    %2156 = vst [vmem:[#allocation8 + $0x120] sm:$0xff] %v1862
    %2157 = vst [vmem:[#allocation8 + $0x128] sm:$0xff] %v1863
    %2158 = vst [vmem:[#allocation8 + $0x130] sm:$0xff] %v1864
    %2159 = vst [vmem:[#allocation8 + $0x138] sm:$0xff] %v1865
    %2160 = vst [vmem:[#allocation8 + $0x140] sm:$0xff] %v1866
    %2161 = vst [vmem:[#allocation8 + $0x148] sm:$0xff] %v1867
    %2162 = vst [vmem:[#allocation8 + $0x150] sm:$0xff] %v1868
    %2163 = vst [vmem:[#allocation8 + $0x158] sm:$0xff] %v1869
    %2164 = vst [vmem:[#allocation8 + $0x160] sm:$0xff] %v1870
    %2165 = vst [vmem:[#allocation8 + $0x168] sm:$0xff] %v1871
    %2166 = vst [vmem:[#allocation8 + $0x170] sm:$0xff] %v1872
    %2167 = vst [vmem:[#allocation8 + $0x178] sm:$0xff] %v1873
    %2168 = vst [vmem:[#allocation8 + $0x180] sm:$0xff] %v1874
    %2169 = vst [vmem:[#allocation8 + $0x188] sm:$0xff] %v1875
    %2170 = vst [vmem:[#allocation8 + $0x190] sm:$0xff] %v1876
    %2171 = vst [vmem:[#allocation8 + $0x198] sm:$0xff] %v1877
    %2172 = vst [vmem:[#allocation8 + $0x1a0] sm:$0xff] %v1878
    %2173 = vst [vmem:[#allocation8 + $0x1a8] sm:$0xff] %v1879
    %2174 = vst [vmem:[#allocation8 + $0x1b0] sm:$0xff] %v1880
    %2175 = vst [vmem:[#allocation8 + $0x1b8] sm:$0xff] %v1881
    %2176 = vst [vmem:[#allocation8 + $0x1c0] sm:$0xff] %v1882
    %2177 = vst [vmem:[#allocation8 + $0x1c8] sm:$0xff] %v1883
    %2178 = vst [vmem:[#allocation8 + $0x1d0] sm:$0xff] %v1884
    %2179 = vst [vmem:[#allocation8 + $0x1d8] sm:$0xff] %v1885
    %2180 = vst [vmem:[#allocation8 + $0x1e0] sm:$0xff] %v1886
    %2181 = vst [vmem:[#allocation8 + $0x1e8] sm:$0xff] %v1887
    %2182 = vst [vmem:[#allocation8 + $0x1f0] sm:$0xff] %v1888
    %2183 = vst [vmem:[#allocation8 + $0x1f8] sm:$0xff] %v1889
    %2184 = vst [vmem:[#allocation8 + $0x200] sm:$0xff] %v1890
    %2185 = vst [vmem:[#allocation8 + $0x208] sm:$0xff] %v1891
    %2186 = vst [vmem:[#allocation8 + $0x210] sm:$0xff] %v1892
    %2187 = vst [vmem:[#allocation8 + $0x218] sm:$0xff] %v1893
    %2188 = vst [vmem:[#allocation8 + $0x220] sm:$0xff] %v1894
    %2189 = vst [vmem:[#allocation8 + $0x228] sm:$0xff] %v1895
    %2190 = vst [vmem:[#allocation8 + $0x230] sm:$0xff] %v1896
    %2191 = vst [vmem:[#allocation8 + $0x238] sm:$0xff] %v1897
    %2192 = vst [vmem:[#allocation8 + $0x240] sm:$0xff] %v1898
    %2193 = vst [vmem:[#allocation8 + $0x248] sm:$0xff] %v1899
    %2194 = vst [vmem:[#allocation8 + $0x250] sm:$0xff] %v1900
    %2195 = vst [vmem:[#allocation8 + $0x258] sm:$0xff] %v1901
    %2196 = vst [vmem:[#allocation8 + $0x260] sm:$0xff] %v1902
    %2197 = vst [vmem:[#allocation8 + $0x268] sm:$0xff] %v1903
    %2198 = vst [vmem:[#allocation8 + $0x270] sm:$0xff] %v1904
    %2199 = vst [vmem:[#allocation8 + $0x278] sm:$0xff] %v1905
    %2200 = vst [vmem:[#allocation8 + $0x280] sm:$0xff] %v1906
    %2201 = vst [vmem:[#allocation8 + $0x288] sm:$0xff] %v1907
    %2202 = vst [vmem:[#allocation8 + $0x290] sm:$0xff] %v1908
    %2203 = vst [vmem:[#allocation8 + $0x298] sm:$0xff] %v1909
    %2204 = vst [vmem:[#allocation8 + $0x2a0] sm:$0xff] %v1910
    %2205 = vst [vmem:[#allocation8 + $0x2a8] sm:$0xff] %v1911
    %2206 = vst [vmem:[#allocation8 + $0x2b0] sm:$0xff] %v1912
    %2207 = vst [vmem:[#allocation8 + $0x2b8] sm:$0xff] %v1913
    %2208 = vst [vmem:[#allocation8 + $0x2c0] sm:$0xff] %v1914
    %2209 = vst [vmem:[#allocation8 + $0x2c8] sm:$0xff] %v1915
    %2210 = vst [vmem:[#allocation8 + $0x2d0] sm:$0xff] %v1916
    %2211 = vst [vmem:[#allocation8 + $0x2d8] sm:$0xff] %v1917
    %2212 = vst [vmem:[#allocation8 + $0x2e0] sm:$0xff] %v1918
    %2213 = vst [vmem:[#allocation8 + $0x2e8] sm:$0xff] %v1919
    %2214 = vst [vmem:[#allocation8 + $0x2f0] sm:$0xff] %v1920
    %2215 = vst [vmem:[#allocation8 + $0x2f8] sm:$0xff] %v1921
    %2216 = vst [vmem:[#allocation8 + $0x300] sm:$0xff] %v1922
    %2217 = vst [vmem:[#allocation8 + $0x308] sm:$0xff] %v1923
    %2218 = vst [vmem:[#allocation8 + $0x310] sm:$0xff] %v1924
    %2219 = vst [vmem:[#allocation8 + $0x318] sm:$0xff] %v1925
    %2220 = vst [vmem:[#allocation8 + $0x320] sm:$0xff] %v1926
    %2221 = vst [vmem:[#allocation8 + $0x328] sm:$0xff] %v1927
    %2222 = vst [vmem:[#allocation8 + $0x330] sm:$0xff] %v1928
    %2223 = vst [vmem:[#allocation8 + $0x338] sm:$0xff] %v1929
    %2224 = vst [vmem:[#allocation8 + $0x340] sm:$0xff] %v1930
    %2225 = vst [vmem:[#allocation8 + $0x348] sm:$0xff] %v1931
    %2226 = vst [vmem:[#allocation8 + $0x350] sm:$0xff] %v1932
    %2227 = vst [vmem:[#allocation8 + $0x358] sm:$0xff] %v1933
    %2228 = vst [vmem:[#allocation8 + $0x360] sm:$0xff] %v1934
    %2229 = vst [vmem:[#allocation8 + $0x368] sm:$0xff] %v1935
    %2230 = vst [vmem:[#allocation8 + $0x370] sm:$0xff] %v1936
    %2231 = vst [vmem:[#allocation8 + $0x378] sm:$0xff] %v1937
    %2232 = vst [vmem:[#allocation8 + $0x380] sm:$0xff] %v1938
    %2233 = vst [vmem:[#allocation8 + $0x388] sm:$0xff] %v1939
    %2234 = vst [vmem:[#allocation8 + $0x390] sm:$0xff] %v1940
    %2235 = vst [vmem:[#allocation8 + $0x398] sm:$0xff] %v1941
    %2236 = vst [vmem:[#allocation8 + $0x3a0] sm:$0xff] %v1942
    %2237 = vst [vmem:[#allocation8 + $0x3a8] sm:$0xff] %v1943
    %2238 = vst [vmem:[#allocation8 + $0x3b0] sm:$0xff] %v1944
    %2239 = vst [vmem:[#allocation8 + $0x3b8] sm:$0xff] %v1945
    %2240 = vst [vmem:[#allocation8 + $0x3c0] sm:$0xff] %v1946
    %2241 = vst [vmem:[#allocation8 + $0x3c8] sm:$0xff] %v1947
    %2242 = vst [vmem:[#allocation8 + $0x3d0] sm:$0xff] %v1948
    %2243 = vst [vmem:[#allocation8 + $0x3d8] sm:$0xff] %v1949
    %2244 = vst [vmem:[#allocation8 + $0x3e0] sm:$0xff] %v1950
    %2245 = vst [vmem:[#allocation8 + $0x3e8] sm:$0xff] %v1951
    %2246 = vst [vmem:[#allocation8 + $0x3f0] sm:$0xff] %v1952
    %2247 = vst [vmem:[#allocation8 + $0x3f8] sm:$0xff] %v1953
    %2248 = vst [vmem:[#allocation8 + $0x400] sm:$0xff] %v1954
    %2249 = vst [vmem:[#allocation8 + $0x408] sm:$0xff] %v1955
    %2250 = vst [vmem:[#allocation8 + $0x410] sm:$0xff] %v1956
    %2251 = vst [vmem:[#allocation8 + $0x418] sm:$0xff] %v1957
    %2252 = vst [vmem:[#allocation8 + $0x420] sm:$0xff] %v1958
    %2253 = vst [vmem:[#allocation8 + $0x428] sm:$0xff] %v1959
    %2254 = vst [vmem:[#allocation8 + $0x430] sm:$0xff] %v1960
    %2255 = vst [vmem:[#allocation8 + $0x438] sm:$0xff] %v1961
    %2256 = vst [vmem:[#allocation8 + $0x440] sm:$0xff] %v1962
    %2257 = vst [vmem:[#allocation8 + $0x448] sm:$0xff] %v1963
    %2258 = vst [vmem:[#allocation8 + $0x450] sm:$0xff] %v1964
    %2259 = vst [vmem:[#allocation8 + $0x458] sm:$0xff] %v1965
    %2260 = vst [vmem:[#allocation8 + $0x460] sm:$0xff] %v1966
    %2261 = vst [vmem:[#allocation8 + $0x468] sm:$0xff] %v1967
    %2262 = vst [vmem:[#allocation8 + $0x470] sm:$0xff] %v1968
    %2263 = vst [vmem:[#allocation8 + $0x478] sm:$0xff] %v1969
    %2264 = vst [vmem:[#allocation8 + $0x480] sm:$0xff] %v1970
    %2265 = vst [vmem:[#allocation8 + $0x488] sm:$0xff] %v1971
    %2266 = vst [vmem:[#allocation8 + $0x490] sm:$0xff] %v1972
    %2267 = vst [vmem:[#allocation8 + $0x498] sm:$0xff] %v1973
    %2268 = vst [vmem:[#allocation8 + $0x4a0] sm:$0xff] %v1974
    %2269 = vst [vmem:[#allocation8 + $0x4a8] sm:$0xff] %v1975
    %2270 = vst [vmem:[#allocation8 + $0x4b0] sm:$0xff] %v1976
    %2271 = vst [vmem:[#allocation8 + $0x4b8] sm:$0xff] %v1977
    %2272 = vst [vmem:[#allocation8 + $0x4c0] sm:$0xff] %v1978
    %2273 = vst [vmem:[#allocation8 + $0x4c8] sm:$0xff] %v1979
    %2274 = vst [vmem:[#allocation8 + $0x4d0] sm:$0xff] %v1980
    %2275 = vst [vmem:[#allocation8 + $0x4d8] sm:$0xff] %v1981
    %2276 = vst [vmem:[#allocation8 + $0x4e0] sm:$0xff] %v1982
    %2277 = vst [vmem:[#allocation8 + $0x4e8] sm:$0xff] %v1983
    %2278 = vst [vmem:[#allocation8 + $0x4f0] sm:$0xff] %v1984
    %2279 = vst [vmem:[#allocation8 + $0x4f8] sm:$0xff] %v1985
    %2280 = vst [vmem:[#allocation8 + $0x500] sm:$0xff] %v1986
    %2281 = vst [vmem:[#allocation8 + $0x508] sm:$0xff] %v1987
    %2282 = vst [vmem:[#allocation8 + $0x510] sm:$0xff] %v1988
    %2283 = vst [vmem:[#allocation8 + $0x518] sm:$0xff] %v1989
    %2284 = vst [vmem:[#allocation8 + $0x520] sm:$0xff] %v1990
    %2285 = vst [vmem:[#allocation8 + $0x528] sm:$0xff] %v1991
    %2286 = vst [vmem:[#allocation8 + $0x530] sm:$0xff] %v1992
    %2287 = vst [vmem:[#allocation8 + $0x538] sm:$0xff] %v1993
    %2288 = vst [vmem:[#allocation8 + $0x540] sm:$0xff] %v1994
    %2289 = vst [vmem:[#allocation8 + $0x548] sm:$0xff] %v1995
    %2290 = vst [vmem:[#allocation8 + $0x550] sm:$0xff] %v1996
    %2291 = vst [vmem:[#allocation8 + $0x558] sm:$0xff] %v1997
    %2292 = vst [vmem:[#allocation8 + $0x560] sm:$0xff] %v1998
    %2293 = vst [vmem:[#allocation8 + $0x568] sm:$0xff] %v1999
    %2294 = vst [vmem:[#allocation8 + $0x570] sm:$0xff] %v2000
    %2295 = vst [vmem:[#allocation8 + $0x578] sm:$0xff] %v2001
    %2296 = vst [vmem:[#allocation8 + $0x580] sm:$0xff] %v2002
    %2297 = vst [vmem:[#allocation8 + $0x588] sm:$0xff] %v2003
    %2298 = vst [vmem:[#allocation8 + $0x590] sm:$0xff] %v2004
    %2299 = vst [vmem:[#allocation8 + $0x598] sm:$0xff] %v2005
    %2300 = vst [vmem:[#allocation8 + $0x5a0] sm:$0xff] %v2006
    %2301 = vst [vmem:[#allocation8 + $0x5a8] sm:$0xff] %v2007
    %2302 = vst [vmem:[#allocation8 + $0x5b0] sm:$0xff] %v2008
    %2303 = vst [vmem:[#allocation8 + $0x5b8] sm:$0xff] %v2009
    %2304 = vst [vmem:[#allocation8 + $0x5c0] sm:$0xff] %v2010
    %2305 = vst [vmem:[#allocation8 + $0x5c8] sm:$0xff] %v2011
    %2306 = vst [vmem:[#allocation8 + $0x5d0] sm:$0xff] %v2012
    %2307 = vst [vmem:[#allocation8 + $0x5d8] sm:$0xff] %v2013
    %2308 = vst [vmem:[#allocation8 + $0x5e0] sm:$0xff] %v2014
    %2309 = vst [vmem:[#allocation8 + $0x5e8] sm:$0xff] %v2015
    %2310 = vst [vmem:[#allocation8 + $0x5f0] sm:$0xff] %v2016
    %2311 = vst [vmem:[#allocation8 + $0x5f8] sm:$0xff] %v2017
    %2312 = vst [vmem:[#allocation8 + $0x600] sm:$0xff] %v2018
    %2313 = vst [vmem:[#allocation8 + $0x608] sm:$0xff] %v2019
    %2314 = vst [vmem:[#allocation8 + $0x610] sm:$0xff] %v2020
    %2315 = vst [vmem:[#allocation8 + $0x618] sm:$0xff] %v2021
    %2316 = vst [vmem:[#allocation8 + $0x620] sm:$0xff] %v2022
    %2317 = vst [vmem:[#allocation8 + $0x628] sm:$0xff] %v2023
    %2318 = vst [vmem:[#allocation8 + $0x630] sm:$0xff] %v2024
    %2319 = vst [vmem:[#allocation8 + $0x638] sm:$0xff] %v2025
    %2320 = vst [vmem:[#allocation8 + $0x640] sm:$0xff] %v2026
    %2321 = vst [vmem:[#allocation8 + $0x648] sm:$0xff] %v2027
    %2322 = vst [vmem:[#allocation8 + $0x650] sm:$0xff] %v2028
    %2323 = vst [vmem:[#allocation8 + $0x658] sm:$0xff] %v2029
    %2324 = vst [vmem:[#allocation8 + $0x660] sm:$0xff] %v2030
    %2325 = vst [vmem:[#allocation8 + $0x668] sm:$0xff] %v2031
    %2326 = vst [vmem:[#allocation8 + $0x670] sm:$0xff] %v2032
    %2327 = vst [vmem:[#allocation8 + $0x678] sm:$0xff] %v2033
    %2328 = vst [vmem:[#allocation8 + $0x680] sm:$0xff] %v2034
    %2329 = vst [vmem:[#allocation8 + $0x688] sm:$0xff] %v2035
    %2330 = vst [vmem:[#allocation8 + $0x690] sm:$0xff] %v2036
    %2331 = vst [vmem:[#allocation8 + $0x698] sm:$0xff] %v2037
    %2332 = vst [vmem:[#allocation8 + $0x6a0] sm:$0xff] %v2038
    %2333 = vst [vmem:[#allocation8 + $0x6a8] sm:$0xff] %v2039
    %2334 = vst [vmem:[#allocation8 + $0x6b0] sm:$0xff] %v2040
    %2335 = vst [vmem:[#allocation8 + $0x6b8] sm:$0xff] %v2041
    %2336 = vst [vmem:[#allocation8 + $0x6c0] sm:$0xff] %v2042
    %2337 = vst [vmem:[#allocation8 + $0x6c8] sm:$0xff] %v2043
    %2338 = vst [vmem:[#allocation8 + $0x6d0] sm:$0xff] %v2044
    %2339 = vst [vmem:[#allocation8 + $0x6d8] sm:$0xff] %v2045
    %2340 = vst [vmem:[#allocation8 + $0x6e0] sm:$0xff] %v2046
    %2341 = vst [vmem:[#allocation8 + $0x6e8] sm:$0xff] %v2047
    %2342 = vst [vmem:[#allocation8 + $0x6f0] sm:$0xff] %v2048
    %2343 = vst [vmem:[#allocation8 + $0x6f8] sm:$0xff] %v2049
    %2344 = vst [vmem:[#allocation8 + $0x700] sm:$0xff] %v2050
    %2345 = vst [vmem:[#allocation8 + $0x708] sm:$0xff] %v2051
    %2346 = vst [vmem:[#allocation8 + $0x710] sm:$0xff] %v2052
    %2347 = vst [vmem:[#allocation8 + $0x718] sm:$0xff] %v2053
    %2348 = vst [vmem:[#allocation8 + $0x720] sm:$0xff] %v2054
    %2349 = vst [vmem:[#allocation8 + $0x728] sm:$0xff] %v2055
    %2350 = vst [vmem:[#allocation8 + $0x730] sm:$0xff] %v2056
    %2351 = vst [vmem:[#allocation8 + $0x738] sm:$0xff] %v2057
    %2352 = vst [vmem:[#allocation8 + $0x740] sm:$0xff] %v2058
    %2353 = vst [vmem:[#allocation8 + $0x748] sm:$0xff] %v2059
    %2354 = vst [vmem:[#allocation8 + $0x750] sm:$0xff] %v2060
    %2355 = vst [vmem:[#allocation8 + $0x758] sm:$0xff] %v2061
    %2356 = vst [vmem:[#allocation8 + $0x760] sm:$0xff] %v2062
    %2357 = vst [vmem:[#allocation8 + $0x768] sm:$0xff] %v2063
    %2358 = vst [vmem:[#allocation8 + $0x770] sm:$0xff] %v2064
    %2359 = vst [vmem:[#allocation8 + $0x778] sm:$0xff] %v2065
    %2360 = vst [vmem:[#allocation8 + $0x780] sm:$0xff] %v2066
    %2361 = vst [vmem:[#allocation8 + $0x788] sm:$0xff] %v2067
    %2362 = vst [vmem:[#allocation8 + $0x790] sm:$0xff] %v2068
    %2363 = vst [vmem:[#allocation8 + $0x798] sm:$0xff] %v2069
    %2364 = vst [vmem:[#allocation8 + $0x7a0] sm:$0xff] %v2070
    %2365 = vst [vmem:[#allocation8 + $0x7a8] sm:$0xff] %v2071
    %2366 = vst [vmem:[#allocation8 + $0x7b0] sm:$0xff] %v2072
    %2367 = vst [vmem:[#allocation8 + $0x7b8] sm:$0xff] %v2073
    %2368 = vst [vmem:[#allocation8 + $0x7c0] sm:$0xff] %v2074
    %2369 = vst [vmem:[#allocation8 + $0x7c8] sm:$0xff] %v2075
    %2370 = vst [vmem:[#allocation8 + $0x7d0] sm:$0xff] %v2076
    %2371 = vst [vmem:[#allocation8 + $0x7d8] sm:$0xff] %v2077
    %2372 = vst [vmem:[#allocation8 + $0x7e0] sm:$0xff] %v2078
    %2373 = vst [vmem:[#allocation8 + $0x7e8] sm:$0xff] %v2079
    %2374 = vst [vmem:[#allocation8 + $0x7f0] sm:$0xff] %v2080
    %2375 = vst [vmem:[#allocation8 + $0x7f8] sm:$0xff] %v2081
    %2376 = vst [vmem:[#allocation8 + $0x800] sm:$0xff] %v2082
    %2377 = vst [vmem:[#allocation8 + $0x808] sm:$0xff] %v2083
    %2378 = vst [vmem:[#allocation8 + $0x810] sm:$0xff] %v2084
    %2379 = vst [vmem:[#allocation8 + $0x818] sm:$0xff] %v2085
    %2380 = vst [vmem:[#allocation8 + $0x820] sm:$0xff] %v2086
    %2381 = vst [vmem:[#allocation8 + $0x828] sm:$0xff] %v2087
    %2382 = vst [vmem:[#allocation8 + $0x830] sm:$0xff] %v2088
    %2383 = vst [vmem:[#allocation8 + $0x838] sm:$0xff] %v2089
    %2384 = vst [vmem:[#allocation8 + $0x840] sm:$0xff] %v2090
    %2385 = vst [vmem:[#allocation8 + $0x848] sm:$0xff] %v2091
    %2386 = vst [vmem:[#allocation8 + $0x850] sm:$0xff] %v2092
    %2387 = vst [vmem:[#allocation8 + $0x858] sm:$0xff] %v2093
    %2388 = vst [vmem:[#allocation8 + $0x860] sm:$0xff] %v2094
    %2389 = vst [vmem:[#allocation8 + $0x868] sm:$0xff] %v2095
    %2390 = vst [vmem:[#allocation8 + $0x870] sm:$0xff] %v2096
    %2391 = vst [vmem:[#allocation8 + $0x878] sm:$0xff] %v2097
    %2392 = vst [vmem:[#allocation8 + $0x880] sm:$0xff] %v2098
    %2393 = vst [vmem:[#allocation8 + $0x888] sm:$0xff] %v2099
    %2394 = vst [vmem:[#allocation8 + $0x890] sm:$0xff] %v2100
    %2395 = vst [vmem:[#allocation8 + $0x898] sm:$0xff] %v2101
    %2396 = vst [vmem:[#allocation8 + $0x8a0] sm:$0xff] %v2102
    %2397 = vst [vmem:[#allocation8 + $0x8a8] sm:$0xff] %v2103
    %2398 = vst [vmem:[#allocation8 + $0x8b0] sm:$0xff] %v2104
    %2399 = vst [vmem:[#allocation8 + $0x8b8] sm:$0xff] %v2105
    %2400 = vst [vmem:[#allocation8 + $0x8c0] sm:$0xff] %v2106
    %2401 = vst [vmem:[#allocation8 + $0x8c8] sm:$0xff] %v2107
    %2402 = vst [vmem:[#allocation8 + $0x8d0] sm:$0xff] %v2108
    %2403 = vst [vmem:[#allocation8 + $0x8d8] sm:$0xff] %v2109
    %2404 = vst [vmem:[#allocation8 + $0x8e0] sm:$0xff] %v2110
    %2405 = vst [vmem:[#allocation8 + $0x8e8] sm:$0xff] %v2111
    %2406 = vst [vmem:[#allocation8 + $0x8f0] sm:$0xff] %v2112
    %2407 = vst [vmem:[#allocation8 + $0x8f8] sm:$0xff] %v2113
    %2408 = vst [vmem:[#allocation8 + $0x900] sm:$0xff] %v2114
    %2409 = vst [vmem:[#allocation8 + $0x908] sm:$0xff] %v2115
    %2410 = vst [vmem:[#allocation8 + $0x910] sm:$0xff] %v2116
    %2411 = vst [vmem:[#allocation8 + $0x918] sm:$0xff] %v2117
    %2412 = vst [vmem:[#allocation8 + $0x920] sm:$0xff] %v2118
    %2413 = vst [vmem:[#allocation8 + $0x928] sm:$0xff] %v2119
    // Predicated region
    $region26: #{tpu_custom_call.1} parent=1 // pred_check
      _
    $region27: #{tpu_custom_call.1} parent=1 // pred_check_branch
      %2415 = sbr.rel (0) target = $region29
    $region28: #{tpu_custom_call.1} parent=1 // pred_region
      %2417 = vsyncadd [#allocation4], 0
      %s2418 = sshll.u32 [#allocation8], 4
      %s2419 = int_to_ptr.vmem [resolvable:$true] %s2418
      %s2420 = sshll.u32 %s3, 4
      %s2421 = int_to_ptr.hbm [resolvable:$true] %s2420
      %2426 = dma.vmem_to_hbm [thread:$0]  %s2419, 37632, %s2421, [#allocation4], 128, 128, 8
    $region29: #{tpu_custom_call.1} parent=1 // pred_fallthru
      _
    // Predicated region
    $region30: #{tpu_custom_call.1} parent=1 // pred_check
      _
    $region31: #{tpu_custom_call.1} parent=1 // pred_check_branch
      %2428 = sbr.rel (0) target = $region33
    $region32: #{tpu_custom_call.1} parent=1 // pred_region
      %2430 = dma.done [#allocation4], 37632
    $region33: #{tpu_custom_call.1} parent=1 // pred_fallthru
      _
    %2431 = vsyncpa [#allocation3], 1
    %2432 = vsyncpa [#allocation6], 1
    %2433 = vsyncpa [#allocation4], 1

</llo_original>
